<compile_context>
chip_gen: v5e
topology: v5e:2x2
jax: 0.10.0
libtpu: 0.0.40
codegen_flags: <defaults>
</compile_context>

<pallas_src>
import jax
import jax.numpy as jnp
from jax.experimental import pallas as pl
from jax.experimental.pallas import tpu as pltpu

# Logical layer sizes (PyTorch module).
D_IN, D1, D2, D3, D_OUT = 100, 128, 256, 512, 784

TB_MAX = 1024    # max batch tile (fits all generations' VMEM with headroom)
GRANULE = 256    # MXU M granularity on v6e/v7x (also a multiple of v5e's 128)


def _cdiv(a, b):
    return -(-a // b)


def _round_up(x, m):
    return _cdiv(x, m) * m


def generator_kernel(z_ref,
                     w1_ref, b1_ref,
                     w2_ref, b2_ref,
                     w3_ref, b3_ref,
                     w4_ref, b4_ref,
                     out_ref):
    # Matmuls on the MXU in bf16 with f32 accumulation; bias add and
    # activations stay in f32 (v5e has no bf16 VPU/EUP path).
    bf = jnp.bfloat16
    # Layer 1: (TB, 100) @ (100, 128) + b1 -> ReLU
    h = jnp.dot(z_ref[...].astype(bf), w1_ref[...],
                preferred_element_type=jnp.float32)
    h = jnp.maximum(h + b1_ref[...], 0.0)
    # Layer 2: (TB, 128) @ (128, 256) + b2 -> ReLU
    h = jnp.dot(h.astype(bf), w2_ref[...],
                preferred_element_type=jnp.float32)
    h = jnp.maximum(h + b2_ref[...], 0.0)
    # Layer 3: (TB, 256) @ (256, 512) + b3 -> ReLU
    h = jnp.dot(h.astype(bf), w3_ref[...],
                preferred_element_type=jnp.float32)
    h = jnp.maximum(h + b3_ref[...], 0.0)
    # Layer 4: (TB, 512) @ (512, 784) + b4 -> Tanh
    h = jnp.dot(h.astype(bf), w4_ref[...],
                preferred_element_type=jnp.float32)
    out_ref[...] = jnp.tanh(h + b4_ref[...])


def init_params(key):
    """Deterministic init mimicking PyTorch's default Linear init:
    U(-1/sqrt(fan_in), 1/sqrt(fan_in)). Weights stored in bf16 (MXU operands),
    biases kept in f32 (added in f32 inside the kernel)."""
    def linear(k, fan_in, fan_out):
        kw, kb = jax.random.split(k)
        bound = 1.0 / jnp.sqrt(fan_in)
        w = jax.random.uniform(kw, (fan_in, fan_out), jnp.float32, -bound, bound)
        b = jax.random.uniform(kb, (fan_out,), jnp.float32, -bound, bound)
        return w.astype(jnp.bfloat16), b.reshape(1, fan_out)

    k1, k2, k3, k4 = jax.random.split(key, 4)
    w1, b1 = linear(k1, D_IN, D1)
    w2, b2 = linear(k2, D1, D2)
    w3, b3 = linear(k3, D2, D3)
    w4, b4 = linear(k4, D3, D_OUT)
    return (w1, b1, w2, b2, w3, b3, w4, b4)


def _batch_tile(B):
    """Pick the batch tile: small batches run in one tile (sublane-rounded);
    large batches use >=2 balanced grid steps (both v7x TCs), tiles <= TB_MAX
    rounded to the MXU M granule so the trailing tile is not mostly masked."""
    if B <= 2 * GRANULE:
        return _round_up(B, 8)
    n_tiles = max(2, _cdiv(B, TB_MAX))
    tb = _round_up(_cdiv(B, n_tiles), GRANULE)
    return min(tb, TB_MAX)


def _vmem_limit_bytes(tb):
    """Size the VMEM request from actual buffer usage instead of the full
    physical VMEM (review: leave headroom on v7x's 64 MiB)."""
    weight_elems = D_IN * D1 + D1 * D2 + D2 * D3 + D3 * D_OUT
    bias_elems = D1 + D2 + D3 + D_OUT
    buf = (2 * tb * D_IN * 4            # z blocks, double-buffered, f32
           + 2 * tb * D_OUT * 4         # out blocks, double-buffered, f32
           + 2 * weight_elems * 2       # bf16 weights (2 pipeline buffers)
           + 2 * bias_elems * 4         # f32 biases
           + tb * (D1 + D2 + D3 + D_OUT) * 6)  # f32 intermediates + bf16 casts
    limit = int(buf * 1.25) + (2 << 20)         # 25% + 2 MiB compiler headroom
    return max(16 << 20, min(limit, 44 << 20))


def generator_forward(z, params):
    """z: (B, 100) float32 -> (B, 1, 28, 28) float32."""
    B = z.shape[0]
    tb = _batch_tile(B)
    grid = (_cdiv(B, tb),)

    w1, b1, w2, b2, w3, b3, w4, b4 = params

    # Activations / outputs: tiled over the batch axis (double-buffered).
    batch_spec = lambda n: pl.BlockSpec((tb, n), lambda i: (i, 0))
    # Weights / biases: constant block index -> DMA'd once, VMEM-resident.
    const_spec = lambda shape: pl.BlockSpec(shape, lambda i: (0, 0))

    flops = 2 * B * (D_IN * D1 + D1 * D2 + D2 * D3 + D3 * D_OUT)
    weight_bytes = 2 * (D_IN * D1 + D1 * D2 + D2 * D3 + D3 * D_OUT)  # bf16
    bias_bytes = 4 * (D1 + D2 + D3 + D_OUT)
    io_bytes = 4 * B * (D_IN + D_OUT)

    out2d = pl.pallas_call(
        generator_kernel,
        out_shape=jax.ShapeDtypeStruct((B, D_OUT), jnp.float32),
        grid=grid,
        in_specs=[
            batch_spec(D_IN),
            const_spec((D_IN, D1)), const_spec((1, D1)),
            const_spec((D1, D2)), const_spec((1, D2)),
            const_spec((D2, D3)), const_spec((1, D3)),
            const_spec((D3, D_OUT)), const_spec((1, D_OUT)),
        ],
        out_specs=batch_spec(D_OUT),
        compiler_params=pltpu.CompilerParams(
            dimension_semantics=("parallel",),
            vmem_limit_bytes=_vmem_limit_bytes(tb),
        ),
        cost_estimate=pl.CostEstimate(
            flops=flops,
            transcendentals=B * D_OUT,
            bytes_accessed=io_bytes + weight_bytes + bias_bytes,
        ),
    )(z, w1, b1, w2, b2, w3, b3, w4, b4)

    # .view(-1, 1, 28, 28): contiguous reshape, no extra HBM pass.
    return out2d.reshape(B, 1, 28, 28)


def _reference_forward(z, params):
    """Plain-JAX reference using the same precision path (bf16 matmul operands,
    f32 accumulation / elementwise)."""
    w1, b1, w2, b2, w3, b3, w4, b4 = params
    bf = jnp.bfloat16
    h = jnp.dot(z.astype(bf), w1, preferred_element_type=jnp.float32)
    h = jnp.maximum(h + b1, 0.0)
    h = jnp.dot(h.astype(bf), w2, preferred_element_type=jnp.float32)
    h = jnp.maximum(h + b2, 0.0)
    h = jnp.dot(h.astype(bf), w3, preferred_element_type=jnp.float32)
    h = jnp.maximum(h + b3, 0.0)
    h = jnp.dot(h.astype(bf), w4, preferred_element_type=jnp.float32)
    return jnp.tanh(h + b4).reshape(-1, 1, 28, 28)


if __name__ == "__main__":
    key = jax.random.PRNGKey(0)
    pkey, zkey1, zkey2 = jax.random.split(key, 3)

    params = init_params(pkey)
    fwd = jax.jit(generator_forward)

    # Small batch: single-tile path.
    B1 = 8
    z1 = jax.random.normal(zkey1, (B1, D_IN), jnp.float32)
    out1 = jax.block_until_ready(fwd(z1, params))
    ref1 = jax.block_until_ready(_reference_forward(z1, params))
    assert out1.shape == (B1, 1, 28, 28), out1.shape
    assert jnp.allclose(out1, ref1, atol=2e-3, rtol=2e-3), float(
        jnp.max(jnp.abs(out1 - ref1)))

    # Larger batch: exercises the 2-step grid (both TCs) + masked trailing tile.
    B2 = 640
    z2 = jax.random.normal(zkey2, (B2, D_IN), jnp.float32)
    out2 = jax.block_until_ready(fwd(z2, params))
    ref2 = jax.block_until_ready(_reference_forward(z2, params))
    assert out2.shape == (B2, 1, 28, 28), out2.shape
    assert jnp.allclose(out2, ref2, atol=2e-3, rtol=2e-3), float(
        jnp.max(jnp.abs(out2 - ref2)))

    print("KERNEL_OK")
</pallas_src>

<mosaic_0001>
module attributes {stable_mosaic.version = 11 : i64} {
  func.func @generator_kernel(%arg0: i32, %arg1: memref<8x100xf32, #tpu.memory_space<vmem>>, %arg2: memref<100x128xbf16, #tpu.memory_space<vmem>>, %arg3: memref<1x128xf32, #tpu.memory_space<vmem>>, %arg4: memref<128x256xbf16, #tpu.memory_space<vmem>>, %arg5: memref<1x256xf32, #tpu.memory_space<vmem>>, %arg6: memref<256x512xbf16, #tpu.memory_space<vmem>>, %arg7: memref<1x512xf32, #tpu.memory_space<vmem>>, %arg8: memref<512x784xbf16, #tpu.memory_space<vmem>>, %arg9: memref<1x784xf32, #tpu.memory_space<vmem>>, %arg10: memref<8x784xf32, #tpu.memory_space<vmem>>) attributes {dimension_semantics = [#tpu.dimension_semantics<parallel>], iteration_bounds = array<i64: 1>, scalar_prefetch = 0 : i64, scratch_operands = 0 : i64, tpu.core_type = #tpu.core_type<tc>, window_params = [{transform_indices = @transform_0, window_bounds = array<i64: 8, 100>}, {pipeline_mode = #tpu.pipeline_mode<synchronous>, transform_indices = @transform_1, window_bounds = array<i64: 100, 128>}, {pipeline_mode = #tpu.pipeline_mode<synchronous>, transform_indices = @transform_2, window_bounds = array<i64: 1, 128>}, {pipeline_mode = #tpu.pipeline_mode<synchronous>, transform_indices = @transform_3, window_bounds = array<i64: 128, 256>}, {pipeline_mode = #tpu.pipeline_mode<synchronous>, transform_indices = @transform_4, window_bounds = array<i64: 1, 256>}, {pipeline_mode = #tpu.pipeline_mode<synchronous>, transform_indices = @transform_5, window_bounds = array<i64: 256, 512>}, {pipeline_mode = #tpu.pipeline_mode<synchronous>, transform_indices = @transform_6, window_bounds = array<i64: 1, 512>}, {pipeline_mode = #tpu.pipeline_mode<synchronous>, transform_indices = @transform_7, window_bounds = array<i64: 512, 784>}, {pipeline_mode = #tpu.pipeline_mode<synchronous>, transform_indices = @transform_8, window_bounds = array<i64: 1, 784>}, {transform_indices = @transform_9, window_bounds = array<i64: 8, 784>}]} {
    %c0 = arith.constant 0 : index
    %c0_0 = arith.constant 0 : index
    %0 = vector.load %arg1[%c0, %c0_0] : memref<8x100xf32, #tpu.memory_space<vmem>>, vector<8x100xf32>
    %1 = arith.truncf %0 : vector<8x100xf32> to vector<8x100xbf16>
    %c0_1 = arith.constant 0 : index
    %c0_2 = arith.constant 0 : index
    %2 = vector.load %arg2[%c0_1, %c0_2] : memref<100x128xbf16, #tpu.memory_space<vmem>>, vector<100x128xbf16>
    %cst = arith.constant dense<0.000000e+00> : vector<8x128xf32>
    %3 = tpu.matmul %1, %2, %cst {dimension_numbers = #tpu.dot_dimension_numbers<[1], [0], [0], [1], [0, 0, 1, 1], [], []>} : vector<8x100xbf16>, vector<100x128xbf16>, vector<8x128xf32> -> vector<8x128xf32>
    %c0_3 = arith.constant 0 : index
    %c0_4 = arith.constant 0 : index
    %4 = vector.load %arg3[%c0_3, %c0_4] : memref<1x128xf32, #tpu.memory_space<vmem>>, vector<1x128xf32>
    %5 = vector.broadcast %4 : vector<1x128xf32> to vector<8x128xf32>
    %6 = arith.addf %3, %5 : vector<8x128xf32>
    %cst_5 = arith.constant 0.000000e+00 : f32
    %7 = vector.broadcast %cst_5 : f32 to vector<8x128xf32>
    %8 = arith.maximumf %6, %7 : vector<8x128xf32>
    %9 = arith.truncf %8 : vector<8x128xf32> to vector<8x128xbf16>
    %c0_6 = arith.constant 0 : index
    %c0_7 = arith.constant 0 : index
    %10 = vector.load %arg4[%c0_6, %c0_7] : memref<128x256xbf16, #tpu.memory_space<vmem>>, vector<128x256xbf16>
    %cst_8 = arith.constant dense<0.000000e+00> : vector<8x256xf32>
    %11 = tpu.matmul %9, %10, %cst_8 {dimension_numbers = #tpu.dot_dimension_numbers<[1], [0], [0], [1], [0, 0, 1, 1], [], []>} : vector<8x128xbf16>, vector<128x256xbf16>, vector<8x256xf32> -> vector<8x256xf32>
    %c0_9 = arith.constant 0 : index
    %c0_10 = arith.constant 0 : index
    %12 = vector.load %arg5[%c0_9, %c0_10] : memref<1x256xf32, #tpu.memory_space<vmem>>, vector<1x256xf32>
    %13 = vector.broadcast %12 : vector<1x256xf32> to vector<8x256xf32>
    %14 = arith.addf %11, %13 : vector<8x256xf32>
    %cst_11 = arith.constant 0.000000e+00 : f32
    %15 = vector.broadcast %cst_11 : f32 to vector<8x256xf32>
    %16 = arith.maximumf %14, %15 : vector<8x256xf32>
    %17 = arith.truncf %16 : vector<8x256xf32> to vector<8x256xbf16>
    %c0_12 = arith.constant 0 : index
    %c0_13 = arith.constant 0 : index
    %18 = vector.load %arg6[%c0_12, %c0_13] : memref<256x512xbf16, #tpu.memory_space<vmem>>, vector<256x512xbf16>
    %cst_14 = arith.constant dense<0.000000e+00> : vector<8x512xf32>
    %19 = tpu.matmul %17, %18, %cst_14 {dimension_numbers = #tpu.dot_dimension_numbers<[1], [0], [0], [1], [0, 0, 1, 1], [], []>} : vector<8x256xbf16>, vector<256x512xbf16>, vector<8x512xf32> -> vector<8x512xf32>
    %c0_15 = arith.constant 0 : index
    %c0_16 = arith.constant 0 : index
    %20 = vector.load %arg7[%c0_15, %c0_16] : memref<1x512xf32, #tpu.memory_space<vmem>>, vector<1x512xf32>
    %21 = vector.broadcast %20 : vector<1x512xf32> to vector<8x512xf32>
    %22 = arith.addf %19, %21 : vector<8x512xf32>
    %cst_17 = arith.constant 0.000000e+00 : f32
    %23 = vector.broadcast %cst_17 : f32 to vector<8x512xf32>
    %24 = arith.maximumf %22, %23 : vector<8x512xf32>
    %25 = arith.truncf %24 : vector<8x512xf32> to vector<8x512xbf16>
    %c0_18 = arith.constant 0 : index
    %c0_19 = arith.constant 0 : index
    %26 = vector.load %arg8[%c0_18, %c0_19] : memref<512x784xbf16, #tpu.memory_space<vmem>>, vector<512x784xbf16>
    %cst_20 = arith.constant dense<0.000000e+00> : vector<8x784xf32>
    %27 = tpu.matmul %25, %26, %cst_20 {dimension_numbers = #tpu.dot_dimension_numbers<[1], [0], [0], [1], [0, 0, 1, 1], [], []>} : vector<8x512xbf16>, vector<512x784xbf16>, vector<8x784xf32> -> vector<8x784xf32>
    %c0_21 = arith.constant 0 : index
    %c0_22 = arith.constant 0 : index
    %28 = vector.load %arg9[%c0_21, %c0_22] : memref<1x784xf32, #tpu.memory_space<vmem>>, vector<1x784xf32>
    %29 = vector.broadcast %28 : vector<1x784xf32> to vector<8x784xf32>
    %30 = arith.addf %27, %29 : vector<8x784xf32>
    %31 = math.tanh %30 : vector<8x784xf32>
    %c0_23 = arith.constant 0 : index
    %c0_24 = arith.constant 0 : index
    %32 = vector.load %arg10[%c0_23, %c0_24] : memref<8x784xf32, #tpu.memory_space<vmem>>, vector<8x784xf32>
    tpu.vector_store %arg10[%c0_23, %c0_24], %31 {strides = array<i32>} : memref<8x784xf32, #tpu.memory_space<vmem>>, vector<8x784xf32>,
    return
  }
  func.func @transform_0(%arg0: i32) -> (i32, i32) {
    %c0_i32 = arith.constant 0 : i32
    %c0_i32_0 = arith.constant 0 : i32
    return %arg0, %c0_i32 : i32, i32
  }
  func.func @transform_1(%arg0: i32) -> (i32, i32) {
    %c0_i32 = arith.constant 0 : i32
    %c0_i32_0 = arith.constant 0 : i32
    %c0_i32_1 = arith.constant 0 : i32
    return %c0_i32, %c0_i32_0 : i32, i32
  }
  func.func @transform_2(%arg0: i32) -> (i32, i32) {
    %c0_i32 = arith.constant 0 : i32
    %c0_i32_0 = arith.constant 0 : i32
    %c0_i32_1 = arith.constant 0 : i32
    return %c0_i32, %c0_i32_0 : i32, i32
  }
  func.func @transform_3(%arg0: i32) -> (i32, i32) {
    %c0_i32 = arith.constant 0 : i32
    %c0_i32_0 = arith.constant 0 : i32
    %c0_i32_1 = arith.constant 0 : i32
    return %c0_i32, %c0_i32_0 : i32, i32
  }
  func.func @transform_4(%arg0: i32) -> (i32, i32) {
    %c0_i32 = arith.constant 0 : i32
    %c0_i32_0 = arith.constant 0 : i32
    %c0_i32_1 = arith.constant 0 : i32
    return %c0_i32, %c0_i32_0 : i32, i32
  }
  func.func @transform_5(%arg0: i32) -> (i32, i32) {
    %c0_i32 = arith.constant 0 : i32
    %c0_i32_0 = arith.constant 0 : i32
    %c0_i32_1 = arith.constant 0 : i32
    return %c0_i32, %c0_i32_0 : i32, i32
  }
  func.func @transform_6(%arg0: i32) -> (i32, i32) {
    %c0_i32 = arith.constant 0 : i32
    %c0_i32_0 = arith.constant 0 : i32
    %c0_i32_1 = arith.constant 0 : i32
    return %c0_i32, %c0_i32_0 : i32, i32
  }
  func.func @transform_7(%arg0: i32) -> (i32, i32) {
    %c0_i32 = arith.constant 0 : i32
    %c0_i32_0 = arith.constant 0 : i32
    %c0_i32_1 = arith.constant 0 : i32
    return %c0_i32, %c0_i32_0 : i32, i32
  }
  func.func @transform_8(%arg0: i32) -> (i32, i32) {
    %c0_i32 = arith.constant 0 : i32
    %c0_i32_0 = arith.constant 0 : i32
    %c0_i32_1 = arith.constant 0 : i32
    return %c0_i32, %c0_i32_0 : i32, i32
  }
  func.func @transform_9(%arg0: i32) -> (i32, i32) {
    %c0_i32 = arith.constant 0 : i32
    %c0_i32_0 = arith.constant 0 : i32
    return %arg0, %c0_i32 : i32, i32
  }
}

</mosaic_0001>

<llo_original>
// kernel: generator_forward.1
$region0: #{generator_forward.1}
  #allocation0 [shape = 'u32[]', space=smem, size = 0x4, offset = 0x4, fixed_abs, tag = 'smem constant byte address 0x4 - core index']
  #allocation1 [shape = 'u32[72,128]{1,0:T(1,128)}', space=vmem, size = 0x9000, scoped, tag = 'internal scratch']
  %s0 = inlined_call_operand.vmem [shape: f32[8,100], index: 0, kind: input, shape index: {}]
  %s1 = inlined_call_operand.vmem [shape: bf16[100,128], index: 1, kind: input, shape index: {}]
  %s2 = inlined_call_operand.vmem [shape: f32[1,128], index: 2, kind: input, shape index: {}]
  %s3 = inlined_call_operand.vmem [shape: bf16[128,256], index: 3, kind: input, shape index: {}]
  %s4 = inlined_call_operand.vmem [shape: f32[1,256], index: 4, kind: input, shape index: {}]
  %s5 = inlined_call_operand.vmem [shape: bf16[256,512], index: 5, kind: input, shape index: {}]
  %s6 = inlined_call_operand.vmem [shape: f32[1,512], index: 6, kind: input, shape index: {}]
  %s7 = inlined_call_operand.vmem [shape: bf16[512,784], index: 7, kind: input, shape index: {}]
  %s8 = inlined_call_operand.vmem [shape: f32[1,784], index: 8, kind: input, shape index: {}]
  %s9 = inlined_call_operand.vmem [shape: f32[8,784], index: 9, kind: output, shape index: {}]
  %s10 = sld [smem:[#allocation0]]
  $region46: #{generator_forward.1} parent=0
    _
  %s12 = ssub.s32 1, %s10
  %s13 = scalar_select 0, %s12, %s10
  // Predicated region
  $region2: #{generator_forward.1} parent=0 // pred_check
    _
  $region3: #{generator_forward.1} parent=0 // pred_check_branch
    %15 = sbr.rel (0) target = $region5
  $region4: #{generator_forward.1} parent=0 // pred_region
    _
  $region5: #{generator_forward.1} parent=0 // pred_fallthru
    _
  // Predicated region
  $region6: #{generator_forward.1} parent=0 // pred_check
    _
  $region7: #{generator_forward.1} parent=0 // pred_check_branch
    %17 = sbr.rel (0) target = $region9
  $region8: #{generator_forward.1} parent=0 // pred_region
    _
  $region9: #{generator_forward.1} parent=0 // pred_fallthru
    _
  // Predicated region
  $region10: #{generator_forward.1} parent=0 // pred_check
    _
  $region11: #{generator_forward.1} parent=0 // pred_check_branch
    %19 = sbr.rel (0) target = $region13
  $region12: #{generator_forward.1} parent=0 // pred_region
    _
  $region13: #{generator_forward.1} parent=0 // pred_fallthru
    _
  // Predicated region
  $region14: #{generator_forward.1} parent=0 // pred_check
    _
  $region15: #{generator_forward.1} parent=0 // pred_check_branch
    %21 = sbr.rel (0) target = $region17
  $region16: #{generator_forward.1} parent=0 // pred_region
    _
  $region17: #{generator_forward.1} parent=0 // pred_fallthru
    _
  // Predicated region
  $region18: #{generator_forward.1} parent=0 // pred_check
    _
  $region19: #{generator_forward.1} parent=0 // pred_check_branch
    %23 = sbr.rel (0) target = $region21
  $region20: #{generator_forward.1} parent=0 // pred_region
    _
  $region21: #{generator_forward.1} parent=0 // pred_fallthru
    _
  // Predicated region
  $region22: #{generator_forward.1} parent=0 // pred_check
    _
  $region23: #{generator_forward.1} parent=0 // pred_check_branch
    %25 = sbr.rel (0) target = $region25
  $region24: #{generator_forward.1} parent=0 // pred_region
    _
  $region25: #{generator_forward.1} parent=0 // pred_fallthru
    _
  // Predicated region
  $region26: #{generator_forward.1} parent=0 // pred_check
    _
  $region27: #{generator_forward.1} parent=0 // pred_check_branch
    %27 = sbr.rel (0) target = $region29
  $region28: #{generator_forward.1} parent=0 // pred_region
    _
  $region29: #{generator_forward.1} parent=0 // pred_fallthru
    _
  // Predicated region
  $region30: #{generator_forward.1} parent=0 // pred_check
    _
  $region31: #{generator_forward.1} parent=0 // pred_check_branch
    %29 = sbr.rel (0) target = $region33
  $region32: #{generator_forward.1} parent=0 // pred_region
    _
  $region33: #{generator_forward.1} parent=0 // pred_fallthru
    _
  // Predicated region
  $region34: #{generator_forward.1} parent=0 // pred_check
    _
  $region35: #{generator_forward.1} parent=0 // pred_check_branch
    %31 = sbr.rel (0) target = $region37
  $region36: #{generator_forward.1} parent=0 // pred_region
    _
  $region37: #{generator_forward.1} parent=0 // pred_fallthru
    _
  %v33 = vld [vmem:[%s0] sm:$0xff]
  %v34 = vpack.c.bf16 %v33, %v33
  %v35 = vld [vmem:[%s1] sm:$0xf]
  %v36 = vld [vmem:[%s1 + $0x4] sm:$0xf]
  %v37 = vld [vmem:[%s1 + $0x8] sm:$0xf]
  %v38 = vld [vmem:[%s1 + $0xc] sm:$0xf]
  %v39 = vld [vmem:[%s1 + $0x10] sm:$0xf]
  %v40 = vld [vmem:[%s1 + $0x14] sm:$0xf]
  %v41 = vld [vmem:[%s1 + $0x18] sm:$0xf]
  %v42 = vld [vmem:[%s1 + $0x1c] sm:$0xf]
  %v43 = vld [vmem:[%s1 + $0x20] sm:$0xf]
  %v44 = vld [vmem:[%s1 + $0x24] sm:$0xf]
  %v45 = vld [vmem:[%s1 + $0x28] sm:$0xf]
  %v46 = vld [vmem:[%s1 + $0x2c] sm:$0xf]
  %v47 = vld [vmem:[%s1 + $0x30] sm:$0x3]
  %v48 = vld [vmem:[%s2] sm:$0x1]
  %v50 = vperm.slane %v48, 0
  %v65 = vunpack.c.l.b16 %v35
  %v66 = vunpack.c.l.b16 %v36
  %v67 = vunpack.c.l.b16 %v37
  %v68 = vunpack.c.l.b16 %v38
  %v69 = vunpack.c.l.b16 %v39
  %v70 = vunpack.c.l.b16 %v40
  %v71 = vunpack.c.l.b16 %v41
  %v72 = vunpack.c.l.b16 %v42
  %v73 = vunpack.c.l.b16 %v43
  %v74 = vunpack.c.l.b16 %v44
  %v75 = vunpack.c.l.b16 %v45
  %v76 = vunpack.c.l.b16 %v46
  %v77 = vunpack.c.l.b16 %v47
  %v78 = vpack.c.b16 %v66, %v65
  %v79 = vpack.c.b16 %v68, %v67
  %v80 = vpack.c.b16 %v70, %v69
  %v81 = vpack.c.b16 %v72, %v71
  %v82 = vpack.c.b16 %v74, %v73
  %v83 = vpack.c.b16 %v76, %v75
  %v84 = vpack.c.b16 %v77, %v77
  %vm91 = vcmask 818176
  %v93 = vsel %vm91, %v34, 0
  %vm95 = vcmask 1041408
  %v97 = vsel %vm95, %v84, 0
  %99 = vmatpush.bf16.msra.mxu0 0
  %100 = vmatpush.bf16.msra.mxu0 %v97
  %101 = vmatpush.bf16.msra.mxu0 %v83
  %102 = vmatpush.bf16.msra.mxu0 %v82
  %103 = vmatpush.bf16.msra.mxu0 %v81
  %104 = vmatpush.bf16.msra.mxu0 %v80
  %105 = vmatpush.bf16.msra.mxu0 %v79
  %106 = vmatpush.bf16.msra.mxu0 %v78
  %107 = vmatmul.bf16.gmra.mxu0 %v93
  %v108 = vpop.f32.mrf.mxu0
  %v109 = vadd.f32 %v50, %v108
  %v110 = vpop.f32.mrf.mxu0
  %111 = vdwg.mxu0
  %v112 = vmax.f32 %v109, 0.0
  %v113 = vpack.c.bf16 %v112, %v112
  %v114 = vld [vmem:[%s3] sm:$0xff]
  %v115 = vld [vmem:[%s3 + $0x8] sm:$0xff]
  %v116 = vld [vmem:[%s3 + $0x10] sm:$0xff]
  %v117 = vld [vmem:[%s3 + $0x18] sm:$0xff]
  %v118 = vld [vmem:[%s3 + $0x20] sm:$0xff]
  %v119 = vld [vmem:[%s3 + $0x28] sm:$0xff]
  %v120 = vld [vmem:[%s3 + $0x30] sm:$0xff]
  %v121 = vld [vmem:[%s3 + $0x38] sm:$0xff]
  %v122 = vld [vmem:[%s3 + $0x40] sm:$0xff]
  %v123 = vld [vmem:[%s3 + $0x48] sm:$0xff]
  %v124 = vld [vmem:[%s3 + $0x50] sm:$0xff]
  %v125 = vld [vmem:[%s3 + $0x58] sm:$0xff]
  %v126 = vld [vmem:[%s3 + $0x60] sm:$0xff]
  %v127 = vld [vmem:[%s3 + $0x68] sm:$0xff]
  %v128 = vld [vmem:[%s3 + $0x70] sm:$0xff]
  %v129 = vld [vmem:[%s3 + $0x78] sm:$0xff]
  %v130 = vld [vmem:[%s4] sm:$0x3]
  %v132 = vperm.slane %v130, 0
  %v133 = vperm.slane %v130, 1
  %v152 = vunpack.c.l.b16 %v114
  %v153 = vunpack.c.h.b16 %v114
  %v154 = vunpack.c.l.b16 %v115
  %v155 = vunpack.c.h.b16 %v115
  %v156 = vunpack.c.l.b16 %v116
  %v157 = vunpack.c.h.b16 %v116
  %v158 = vunpack.c.l.b16 %v117
  %v159 = vunpack.c.h.b16 %v117
  %v160 = vunpack.c.l.b16 %v118
  %v161 = vunpack.c.h.b16 %v118
  %v162 = vunpack.c.l.b16 %v119
  %v163 = vunpack.c.h.b16 %v119
  %v164 = vunpack.c.l.b16 %v120
  %v165 = vunpack.c.h.b16 %v120
  %v166 = vunpack.c.l.b16 %v121
  %v167 = vunpack.c.h.b16 %v121
  %v168 = vunpack.c.l.b16 %v122
  %v169 = vunpack.c.h.b16 %v122
  %v170 = vunpack.c.l.b16 %v123
  %v171 = vunpack.c.h.b16 %v123
  %v172 = vunpack.c.l.b16 %v124
  %v173 = vunpack.c.h.b16 %v124
  %v174 = vunpack.c.l.b16 %v125
  %v175 = vunpack.c.h.b16 %v125
  %v176 = vunpack.c.l.b16 %v126
  %v177 = vunpack.c.h.b16 %v126
  %v178 = vunpack.c.l.b16 %v127
  %v179 = vunpack.c.h.b16 %v127
  %v180 = vunpack.c.l.b16 %v128
  %v181 = vunpack.c.h.b16 %v128
  %v182 = vunpack.c.l.b16 %v129
  %v183 = vunpack.c.h.b16 %v129
  %v184 = vpack.c.b16 %v154, %v152
  %v185 = vpack.c.b16 %v155, %v153
  %v186 = vpack.c.b16 %v158, %v156
  %v187 = vpack.c.b16 %v159, %v157
  %v188 = vpack.c.b16 %v162, %v160
  %v189 = vpack.c.b16 %v163, %v161
  %v190 = vpack.c.b16 %v166, %v164
  %v191 = vpack.c.b16 %v167, %v165
  %v192 = vpack.c.b16 %v170, %v168
  %v193 = vpack.c.b16 %v171, %v169
  %v194 = vpack.c.b16 %v174, %v172
  %v195 = vpack.c.b16 %v175, %v173
  %v196 = vpack.c.b16 %v178, %v176
  %v197 = vpack.c.b16 %v179, %v177
  %v198 = vpack.c.b16 %v182, %v180
  %v199 = vpack.c.b16 %v183, %v181
  %216 = vmatpush.bf16.msra.mxu0 %v198
  %217 = vmatpush.bf16.msra.mxu0 %v196
  %218 = vmatpush.bf16.msra.mxu0 %v194
  %219 = vmatpush.bf16.msra.mxu0 %v192
  %220 = vmatpush.bf16.msra.mxu0 %v190
  %221 = vmatpush.bf16.msra.mxu0 %v188
  %222 = vmatpush.bf16.msra.mxu0 %v186
  %223 = vmatpush.bf16.msra.mxu0 %v184
  %224 = vmatmul.bf16.gmra.mxu0 %v113
  %v225 = vpop.f32.mrf.mxu0
  %v226 = vadd.f32 %v132, %v225
  %v227 = vpop.f32.mrf.mxu0
  %228 = vdwg.mxu0
  %229 = vmatpush.bf16.msra.mxu0 %v199
  %230 = vmatpush.bf16.msra.mxu0 %v197
  %231 = vmatpush.bf16.msra.mxu0 %v195
  %232 = vmatpush.bf16.msra.mxu0 %v193
  %233 = vmatpush.bf16.msra.mxu0 %v191
  %234 = vmatpush.bf16.msra.mxu0 %v189
  %235 = vmatpush.bf16.msra.mxu0 %v187
  %236 = vmatpush.bf16.msra.mxu0 %v185
  %237 = vmatmul.bf16.gmra.mxu0 %v113
  %v238 = vpop.f32.mrf.mxu0
  %v239 = vadd.f32 %v133, %v238
  %v240 = vpop.f32.mrf.mxu0
  %241 = vdwg.mxu0
  %v242 = vmax.f32 %v226, 0.0
  %v243 = vmax.f32 %v239, 0.0
  %v244 = vpack.c.bf16 %v242, %v242
  %v245 = vpack.c.bf16 %v243, %v243
  %v246 = vld [vmem:[%s5] sm:$0xff]
  %v247 = vld [vmem:[%s5 + $0x8] sm:$0xff]
  %v248 = vld [vmem:[%s5 + $0x10] sm:$0xff]
  %v249 = vld [vmem:[%s5 + $0x18] sm:$0xff]
  %v250 = vld [vmem:[%s5 + $0x20] sm:$0xff]
  %v251 = vld [vmem:[%s5 + $0x28] sm:$0xff]
  %v252 = vld [vmem:[%s5 + $0x30] sm:$0xff]
  %v253 = vld [vmem:[%s5 + $0x38] sm:$0xff]
  %v254 = vld [vmem:[%s5 + $0x40] sm:$0xff]
  %v255 = vld [vmem:[%s5 + $0x48] sm:$0xff]
  %v256 = vld [vmem:[%s5 + $0x50] sm:$0xff]
  %v257 = vld [vmem:[%s5 + $0x58] sm:$0xff]
  %v258 = vld [vmem:[%s5 + $0x60] sm:$0xff]
  %v259 = vld [vmem:[%s5 + $0x68] sm:$0xff]
  %v260 = vld [vmem:[%s5 + $0x70] sm:$0xff]
  %v261 = vld [vmem:[%s5 + $0x78] sm:$0xff]
  %v262 = vld [vmem:[%s5 + $0x80] sm:$0xff]
  %v263 = vld [vmem:[%s5 + $0x88] sm:$0xff]
  %v264 = vld [vmem:[%s5 + $0x90] sm:$0xff]
  %v265 = vld [vmem:[%s5 + $0x98] sm:$0xff]
  %v266 = vld [vmem:[%s5 + $0xa0] sm:$0xff]
  %v267 = vld [vmem:[%s5 + $0xa8] sm:$0xff]
  %v268 = vld [vmem:[%s5 + $0xb0] sm:$0xff]
  %v269 = vld [vmem:[%s5 + $0xb8] sm:$0xff]
  %v270 = vld [vmem:[%s5 + $0xc0] sm:$0xff]
  %v271 = vld [vmem:[%s5 + $0xc8] sm:$0xff]
  %v272 = vld [vmem:[%s5 + $0xd0] sm:$0xff]
  %v273 = vld [vmem:[%s5 + $0xd8] sm:$0xff]
  %v274 = vld [vmem:[%s5 + $0xe0] sm:$0xff]
  %v275 = vld [vmem:[%s5 + $0xe8] sm:$0xff]
  %v276 = vld [vmem:[%s5 + $0xf0] sm:$0xff]
  %v277 = vld [vmem:[%s5 + $0xf8] sm:$0xff]
  %v278 = vld [vmem:[%s5 + $0x100] sm:$0xff]
  %v279 = vld [vmem:[%s5 + $0x108] sm:$0xff]
  %v280 = vld [vmem:[%s5 + $0x110] sm:$0xff]
  %v281 = vld [vmem:[%s5 + $0x118] sm:$0xff]
  %v282 = vld [vmem:[%s5 + $0x120] sm:$0xff]
  %v283 = vld [vmem:[%s5 + $0x128] sm:$0xff]
  %v284 = vld [vmem:[%s5 + $0x130] sm:$0xff]
  %v285 = vld [vmem:[%s5 + $0x138] sm:$0xff]
  %v286 = vld [vmem:[%s5 + $0x140] sm:$0xff]
  %v287 = vld [vmem:[%s5 + $0x148] sm:$0xff]
  %v288 = vld [vmem:[%s5 + $0x150] sm:$0xff]
  %v289 = vld [vmem:[%s5 + $0x158] sm:$0xff]
  %v290 = vld [vmem:[%s5 + $0x160] sm:$0xff]
  %v291 = vld [vmem:[%s5 + $0x168] sm:$0xff]
  %v292 = vld [vmem:[%s5 + $0x170] sm:$0xff]
  %v293 = vld [vmem:[%s5 + $0x178] sm:$0xff]
  %v294 = vld [vmem:[%s5 + $0x180] sm:$0xff]
  %v295 = vld [vmem:[%s5 + $0x188] sm:$0xff]
  %v296 = vld [vmem:[%s5 + $0x190] sm:$0xff]
  %v297 = vld [vmem:[%s5 + $0x198] sm:$0xff]
  %v298 = vld [vmem:[%s5 + $0x1a0] sm:$0xff]
  %v299 = vld [vmem:[%s5 + $0x1a8] sm:$0xff]
  %v300 = vld [vmem:[%s5 + $0x1b0] sm:$0xff]
  %v301 = vld [vmem:[%s5 + $0x1b8] sm:$0xff]
  %v302 = vld [vmem:[%s5 + $0x1c0] sm:$0xff]
  %v303 = vld [vmem:[%s5 + $0x1c8] sm:$0xff]
  %v304 = vld [vmem:[%s5 + $0x1d0] sm:$0xff]
  %v305 = vld [vmem:[%s5 + $0x1d8] sm:$0xff]
  %v306 = vld [vmem:[%s5 + $0x1e0] sm:$0xff]
  %v307 = vld [vmem:[%s5 + $0x1e8] sm:$0xff]
  %v308 = vld [vmem:[%s5 + $0x1f0] sm:$0xff]
  %v309 = vld [vmem:[%s5 + $0x1f8] sm:$0xff]
  %v310 = vld [vmem:[%s6] sm:$0xf]
  %v312 = vperm.slane %v310, 0
  %v313 = vperm.slane %v310, 1
  %v314 = vperm.slane %v310, 2
  %v315 = vperm.slane %v310, 3
  %v384 = vunpack.c.l.b16 %v246
  %v385 = vunpack.c.h.b16 %v246
  %v386 = vunpack.c.l.b16 %v247
  %v387 = vunpack.c.h.b16 %v247
  %v388 = vunpack.c.l.b16 %v248
  %v389 = vunpack.c.h.b16 %v248
  %v390 = vunpack.c.l.b16 %v249
  %v391 = vunpack.c.h.b16 %v249
  %v392 = vunpack.c.l.b16 %v250
  %v393 = vunpack.c.h.b16 %v250
  %v394 = vunpack.c.l.b16 %v251
  %v395 = vunpack.c.h.b16 %v251
  %v396 = vunpack.c.l.b16 %v252
  %v397 = vunpack.c.h.b16 %v252
  %v398 = vunpack.c.l.b16 %v253
  %v399 = vunpack.c.h.b16 %v253
  %v400 = vunpack.c.l.b16 %v254
  %v401 = vunpack.c.h.b16 %v254
  %v402 = vunpack.c.l.b16 %v255
  %v403 = vunpack.c.h.b16 %v255
  %v404 = vunpack.c.l.b16 %v256
  %v405 = vunpack.c.h.b16 %v256
  %v406 = vunpack.c.l.b16 %v257
  %v407 = vunpack.c.h.b16 %v257
  %v408 = vunpack.c.l.b16 %v258
  %v409 = vunpack.c.h.b16 %v258
  %v410 = vunpack.c.l.b16 %v259
  %v411 = vunpack.c.h.b16 %v259
  %v412 = vunpack.c.l.b16 %v260
  %v413 = vunpack.c.h.b16 %v260
  %v414 = vunpack.c.l.b16 %v261
  %v415 = vunpack.c.h.b16 %v261
  %v416 = vunpack.c.l.b16 %v262
  %v417 = vunpack.c.h.b16 %v262
  %v418 = vunpack.c.l.b16 %v263
  %v419 = vunpack.c.h.b16 %v263
  %v420 = vunpack.c.l.b16 %v264
  %v421 = vunpack.c.h.b16 %v264
  %v422 = vunpack.c.l.b16 %v265
  %v423 = vunpack.c.h.b16 %v265
  %v424 = vunpack.c.l.b16 %v266
  %v425 = vunpack.c.h.b16 %v266
  %v426 = vunpack.c.l.b16 %v267
  %v427 = vunpack.c.h.b16 %v267
  %v428 = vunpack.c.l.b16 %v268
  %v429 = vunpack.c.h.b16 %v268
  %v430 = vunpack.c.l.b16 %v269
  %v431 = vunpack.c.h.b16 %v269
  %v432 = vunpack.c.l.b16 %v270
  %v433 = vunpack.c.h.b16 %v270
  %v434 = vunpack.c.l.b16 %v271
  %v435 = vunpack.c.h.b16 %v271
  %v436 = vunpack.c.l.b16 %v272
  %v437 = vunpack.c.h.b16 %v272
  %v438 = vunpack.c.l.b16 %v273
  %v439 = vunpack.c.h.b16 %v273
  %v440 = vunpack.c.l.b16 %v274
  %v441 = vunpack.c.h.b16 %v274
  %v442 = vunpack.c.l.b16 %v275
  %v443 = vunpack.c.h.b16 %v275
  %v444 = vunpack.c.l.b16 %v276
  %v445 = vunpack.c.h.b16 %v276
  %v446 = vunpack.c.l.b16 %v277
  %v447 = vunpack.c.h.b16 %v277
  %v448 = vunpack.c.l.b16 %v278
  %v449 = vunpack.c.h.b16 %v278
  %v450 = vunpack.c.l.b16 %v279
  %v451 = vunpack.c.h.b16 %v279
  %v452 = vunpack.c.l.b16 %v280
  %v453 = vunpack.c.h.b16 %v280
  %v454 = vunpack.c.l.b16 %v281
  %v455 = vunpack.c.h.b16 %v281
  %v456 = vunpack.c.l.b16 %v282
  %v457 = vunpack.c.h.b16 %v282
  %v458 = vunpack.c.l.b16 %v283
  %v459 = vunpack.c.h.b16 %v283
  %v460 = vunpack.c.l.b16 %v284
  %v461 = vunpack.c.h.b16 %v284
  %v462 = vunpack.c.l.b16 %v285
  %v463 = vunpack.c.h.b16 %v285
  %v464 = vunpack.c.l.b16 %v286
  %v465 = vunpack.c.h.b16 %v286
  %v466 = vunpack.c.l.b16 %v287
  %v467 = vunpack.c.h.b16 %v287
  %v468 = vunpack.c.l.b16 %v288
  %v469 = vunpack.c.h.b16 %v288
  %v470 = vunpack.c.l.b16 %v289
  %v471 = vunpack.c.h.b16 %v289
  %v472 = vunpack.c.l.b16 %v290
  %v473 = vunpack.c.h.b16 %v290
  %v474 = vunpack.c.l.b16 %v291
  %v475 = vunpack.c.h.b16 %v291
  %v476 = vunpack.c.l.b16 %v292
  %v477 = vunpack.c.h.b16 %v292
  %v478 = vunpack.c.l.b16 %v293
  %v479 = vunpack.c.h.b16 %v293
  %v480 = vunpack.c.l.b16 %v294
  %v481 = vunpack.c.h.b16 %v294
  %v482 = vunpack.c.l.b16 %v295
  %v483 = vunpack.c.h.b16 %v295
  %v484 = vunpack.c.l.b16 %v296
  %v485 = vunpack.c.h.b16 %v296
  %v486 = vunpack.c.l.b16 %v297
  %v487 = vunpack.c.h.b16 %v297
  %v488 = vunpack.c.l.b16 %v298
  %v489 = vunpack.c.h.b16 %v298
  %v490 = vunpack.c.l.b16 %v299
  %v491 = vunpack.c.h.b16 %v299
  %v492 = vunpack.c.l.b16 %v300
  %v493 = vunpack.c.h.b16 %v300
  %v494 = vunpack.c.l.b16 %v301
  %v495 = vunpack.c.h.b16 %v301
  %v496 = vunpack.c.l.b16 %v302
  %v497 = vunpack.c.h.b16 %v302
  %v498 = vunpack.c.l.b16 %v303
  %v499 = vunpack.c.h.b16 %v303
  %v500 = vunpack.c.l.b16 %v304
  %v501 = vunpack.c.h.b16 %v304
  %v502 = vunpack.c.l.b16 %v305
  %v503 = vunpack.c.h.b16 %v305
  %v504 = vunpack.c.l.b16 %v306
  %v505 = vunpack.c.h.b16 %v306
  %v506 = vunpack.c.l.b16 %v307
  %v507 = vunpack.c.h.b16 %v307
  %v508 = vunpack.c.l.b16 %v308
  %v509 = vunpack.c.h.b16 %v308
  %v510 = vunpack.c.l.b16 %v309
  %v511 = vunpack.c.h.b16 %v309
  %v512 = vpack.c.b16 %v388, %v384
  %v513 = vpack.c.b16 %v389, %v385
  %v514 = vpack.c.b16 %v390, %v386
  %v515 = vpack.c.b16 %v391, %v387
  %v516 = vpack.c.b16 %v396, %v392
  %v517 = vpack.c.b16 %v397, %v393
  %v518 = vpack.c.b16 %v398, %v394
  %v519 = vpack.c.b16 %v399, %v395
  %v520 = vpack.c.b16 %v404, %v400
  %v521 = vpack.c.b16 %v405, %v401
  %v522 = vpack.c.b16 %v406, %v402
  %v523 = vpack.c.b16 %v407, %v403
  %v524 = vpack.c.b16 %v412, %v408
  %v525 = vpack.c.b16 %v413, %v409
  %v526 = vpack.c.b16 %v414, %v410
  %v527 = vpack.c.b16 %v415, %v411
  %v528 = vpack.c.b16 %v420, %v416
  %v529 = vpack.c.b16 %v421, %v417
  %v530 = vpack.c.b16 %v422, %v418
  %v531 = vpack.c.b16 %v423, %v419
  %v532 = vpack.c.b16 %v428, %v424
  %v533 = vpack.c.b16 %v429, %v425
  %v534 = vpack.c.b16 %v430, %v426
  %v535 = vpack.c.b16 %v431, %v427
  %v536 = vpack.c.b16 %v436, %v432
  %v537 = vpack.c.b16 %v437, %v433
  %v538 = vpack.c.b16 %v438, %v434
  %v539 = vpack.c.b16 %v439, %v435
  %v540 = vpack.c.b16 %v444, %v440
  %v541 = vpack.c.b16 %v445, %v441
  %v542 = vpack.c.b16 %v446, %v442
  %v543 = vpack.c.b16 %v447, %v443
  %v544 = vpack.c.b16 %v452, %v448
  %v545 = vpack.c.b16 %v453, %v449
  %v546 = vpack.c.b16 %v454, %v450
  %v547 = vpack.c.b16 %v455, %v451
  %v548 = vpack.c.b16 %v460, %v456
  %v549 = vpack.c.b16 %v461, %v457
  %v550 = vpack.c.b16 %v462, %v458
  %v551 = vpack.c.b16 %v463, %v459
  %v552 = vpack.c.b16 %v468, %v464
  %v553 = vpack.c.b16 %v469, %v465
  %v554 = vpack.c.b16 %v470, %v466
  %v555 = vpack.c.b16 %v471, %v467
  %v556 = vpack.c.b16 %v476, %v472
  %v557 = vpack.c.b16 %v477, %v473
  %v558 = vpack.c.b16 %v478, %v474
  %v559 = vpack.c.b16 %v479, %v475
  %v560 = vpack.c.b16 %v484, %v480
  %v561 = vpack.c.b16 %v485, %v481
  %v562 = vpack.c.b16 %v486, %v482
  %v563 = vpack.c.b16 %v487, %v483
  %v564 = vpack.c.b16 %v492, %v488
  %v565 = vpack.c.b16 %v493, %v489
  %v566 = vpack.c.b16 %v494, %v490
  %v567 = vpack.c.b16 %v495, %v491
  %v568 = vpack.c.b16 %v500, %v496
  %v569 = vpack.c.b16 %v501, %v497
  %v570 = vpack.c.b16 %v502, %v498
  %v571 = vpack.c.b16 %v503, %v499
  %v572 = vpack.c.b16 %v508, %v504
  %v573 = vpack.c.b16 %v509, %v505
  %v574 = vpack.c.b16 %v510, %v506
  %v575 = vpack.c.b16 %v511, %v507
  %640 = vmatpush.bf16.msra.mxu0 %v540
  %641 = vmatpush.bf16.msra.mxu0 %v536
  %642 = vmatpush.bf16.msra.mxu0 %v532
  %643 = vmatpush.bf16.msra.mxu0 %v528
  %644 = vmatpush.bf16.msra.mxu0 %v524
  %645 = vmatpush.bf16.msra.mxu0 %v520
  %646 = vmatpush.bf16.msra.mxu0 %v516
  %647 = vmatpush.bf16.msra.mxu0 %v512
  %648 = vmatmul.bf16.gmra.mxu0 %v244
  %v649 = vpop.f32.mrf.mxu0
  %v650 = vadd.f32 %v312, %v649
  %v651 = vpop.f32.mrf.mxu0
  %652 = vdwg.mxu0
  %653 = vmatpush.bf16.msra.mxu0 %v572
  %654 = vmatpush.bf16.msra.mxu0 %v568
  %655 = vmatpush.bf16.msra.mxu0 %v564
  %656 = vmatpush.bf16.msra.mxu0 %v560
  %657 = vmatpush.bf16.msra.mxu0 %v556
  %658 = vmatpush.bf16.msra.mxu0 %v552
  %659 = vmatpush.bf16.msra.mxu0 %v548
  %660 = vmatpush.bf16.msra.mxu0 %v544
  %661 = vmatmul.bf16.gmra.mxu0 %v245
  %v662 = vpop.f32.mrf.mxu0
  %v663 = vadd.f32 %v650, %v662
  %v664 = vpop.f32.mrf.mxu0
  %665 = vdwg.mxu0
  %666 = vmatpush.bf16.msra.mxu0 %v541
  %667 = vmatpush.bf16.msra.mxu0 %v537
  %668 = vmatpush.bf16.msra.mxu0 %v533
  %669 = vmatpush.bf16.msra.mxu0 %v529
  %670 = vmatpush.bf16.msra.mxu0 %v525
  %671 = vmatpush.bf16.msra.mxu0 %v521
  %672 = vmatpush.bf16.msra.mxu0 %v517
  %673 = vmatpush.bf16.msra.mxu0 %v513
  %674 = vmatmul.bf16.gmra.mxu0 %v244
  %v675 = vpop.f32.mrf.mxu0
  %v676 = vadd.f32 %v313, %v675
  %v677 = vpop.f32.mrf.mxu0
  %678 = vdwg.mxu0
  %679 = vmatpush.bf16.msra.mxu0 %v573
  %680 = vmatpush.bf16.msra.mxu0 %v569
  %681 = vmatpush.bf16.msra.mxu0 %v565
  %682 = vmatpush.bf16.msra.mxu0 %v561
  %683 = vmatpush.bf16.msra.mxu0 %v557
  %684 = vmatpush.bf16.msra.mxu0 %v553
  %685 = vmatpush.bf16.msra.mxu0 %v549
  %686 = vmatpush.bf16.msra.mxu0 %v545
  %687 = vmatmul.bf16.gmra.mxu0 %v245
  %v688 = vpop.f32.mrf.mxu0
  %v689 = vadd.f32 %v676, %v688
  %v690 = vpop.f32.mrf.mxu0
  %691 = vdwg.mxu0
  %692 = vmatpush.bf16.msra.mxu0 %v542
  %693 = vmatpush.bf16.msra.mxu0 %v538
  %694 = vmatpush.bf16.msra.mxu0 %v534
  %695 = vmatpush.bf16.msra.mxu0 %v530
  %696 = vmatpush.bf16.msra.mxu0 %v526
  %697 = vmatpush.bf16.msra.mxu0 %v522
  %698 = vmatpush.bf16.msra.mxu0 %v518
  %699 = vmatpush.bf16.msra.mxu0 %v514
  %700 = vmatmul.bf16.gmra.mxu0 %v244
  %v701 = vpop.f32.mrf.mxu0
  %v702 = vadd.f32 %v314, %v701
  %v703 = vpop.f32.mrf.mxu0
  %704 = vdwg.mxu0
  %705 = vmatpush.bf16.msra.mxu0 %v574
  %706 = vmatpush.bf16.msra.mxu0 %v570
  %707 = vmatpush.bf16.msra.mxu0 %v566
  %708 = vmatpush.bf16.msra.mxu0 %v562
  %709 = vmatpush.bf16.msra.mxu0 %v558
  %710 = vmatpush.bf16.msra.mxu0 %v554
  %711 = vmatpush.bf16.msra.mxu0 %v550
  %712 = vmatpush.bf16.msra.mxu0 %v546
  %713 = vmatmul.bf16.gmra.mxu0 %v245
  %v714 = vpop.f32.mrf.mxu0
  %v715 = vadd.f32 %v702, %v714
  %v716 = vpop.f32.mrf.mxu0
  %717 = vdwg.mxu0
  %718 = vmatpush.bf16.msra.mxu0 %v543
  %719 = vmatpush.bf16.msra.mxu0 %v539
  %720 = vmatpush.bf16.msra.mxu0 %v535
  %721 = vmatpush.bf16.msra.mxu0 %v531
  %722 = vmatpush.bf16.msra.mxu0 %v527
  %723 = vmatpush.bf16.msra.mxu0 %v523
  %724 = vmatpush.bf16.msra.mxu0 %v519
  %725 = vmatpush.bf16.msra.mxu0 %v515
  %726 = vmatmul.bf16.gmra.mxu0 %v244
  %v727 = vpop.f32.mrf.mxu0
  %v728 = vadd.f32 %v315, %v727
  %v729 = vpop.f32.mrf.mxu0
  %730 = vdwg.mxu0
  %731 = vmatpush.bf16.msra.mxu0 %v575
  %732 = vmatpush.bf16.msra.mxu0 %v571
  %733 = vmatpush.bf16.msra.mxu0 %v567
  %734 = vmatpush.bf16.msra.mxu0 %v563
  %735 = vmatpush.bf16.msra.mxu0 %v559
  %736 = vmatpush.bf16.msra.mxu0 %v555
  %737 = vmatpush.bf16.msra.mxu0 %v551
  %738 = vmatpush.bf16.msra.mxu0 %v547
  %739 = vmatmul.bf16.gmra.mxu0 %v245
  %v740 = vpop.f32.mrf.mxu0
  %v741 = vadd.f32 %v728, %v740
  %v742 = vpop.f32.mrf.mxu0
  %743 = vdwg.mxu0
  %v744 = vmax.f32 %v663, 0.0
  %v745 = vmax.f32 %v689, 0.0
  %v746 = vmax.f32 %v715, 0.0
  %v747 = vmax.f32 %v741, 0.0
  %v748 = vpack.c.bf16 %v744, %v744
  %v749 = vpack.c.bf16 %v745, %v745
  %v750 = vpack.c.bf16 %v746, %v746
  %v751 = vpack.c.bf16 %v747, %v747
  %v752 = vld [vmem:[%s7] sm:$0xff]
  %v753 = vld [vmem:[%s7 + $0x8] sm:$0xff]
  %v754 = vld [vmem:[%s7 + $0x10] sm:$0xff]
  %v755 = vld [vmem:[%s7 + $0x18] sm:$0xf]
  %v756 = vld [vmem:[%s7 + $0x1c] sm:$0xff]
  %v757 = vld [vmem:[%s7 + $0x24] sm:$0xff]
  %v758 = vld [vmem:[%s7 + $0x2c] sm:$0xff]
  %v759 = vld [vmem:[%s7 + $0x34] sm:$0xf]
  %v760 = vld [vmem:[%s7 + $0x38] sm:$0xff]
  %v761 = vld [vmem:[%s7 + $0x40] sm:$0xff]
  %v762 = vld [vmem:[%s7 + $0x48] sm:$0xff]
  %v763 = vld [vmem:[%s7 + $0x50] sm:$0xf]
  %v764 = vld [vmem:[%s7 + $0x54] sm:$0xff]
  %v765 = vld [vmem:[%s7 + $0x5c] sm:$0xff]
  %v766 = vld [vmem:[%s7 + $0x64] sm:$0xff]
  %v767 = vld [vmem:[%s7 + $0x6c] sm:$0xf]
  %v768 = vld [vmem:[%s7 + $0x70] sm:$0xff]
  %v769 = vld [vmem:[%s7 + $0x78] sm:$0xff]
  %v770 = vld [vmem:[%s7 + $0x80] sm:$0xff]
  %v771 = vld [vmem:[%s7 + $0x88] sm:$0xf]
  %v772 = vld [vmem:[%s7 + $0x8c] sm:$0xff]
  %v773 = vld [vmem:[%s7 + $0x94] sm:$0xff]
  %v774 = vld [vmem:[%s7 + $0x9c] sm:$0xff]
  %v775 = vld [vmem:[%s7 + $0xa4] sm:$0xf]
  %v776 = vld [vmem:[%s7 + $0xa8] sm:$0xff]
  %v777 = vld [vmem:[%s7 + $0xb0] sm:$0xff]
  %v778 = vld [vmem:[%s7 + $0xb8] sm:$0xff]
  %v779 = vld [vmem:[%s7 + $0xc0] sm:$0xf]
  %v780 = vld [vmem:[%s7 + $0xc4] sm:$0xff]
  %v781 = vld [vmem:[%s7 + $0xcc] sm:$0xff]
  %v782 = vld [vmem:[%s7 + $0xd4] sm:$0xff]
  %v783 = vld [vmem:[%s7 + $0xdc] sm:$0xf]
  %v784 = vld [vmem:[%s7 + $0xe0] sm:$0xff]
  %v785 = vld [vmem:[%s7 + $0xe8] sm:$0xff]
  %v786 = vld [vmem:[%s7 + $0xf0] sm:$0xff]
  %v787 = vld [vmem:[%s7 + $0xf8] sm:$0xf]
  %v788 = vld [vmem:[%s7 + $0xfc] sm:$0xff]
  %v789 = vld [vmem:[%s7 + $0x104] sm:$0xff]
  %v790 = vld [vmem:[%s7 + $0x10c] sm:$0xff]
  %v791 = vld [vmem:[%s7 + $0x114] sm:$0xf]
  %v792 = vld [vmem:[%s7 + $0x118] sm:$0xff]
  %v793 = vld [vmem:[%s7 + $0x120] sm:$0xff]
  %v794 = vld [vmem:[%s7 + $0x128] sm:$0xff]
  %v795 = vld [vmem:[%s7 + $0x130] sm:$0xf]
  %v796 = vld [vmem:[%s7 + $0x134] sm:$0xff]
  %v797 = vld [vmem:[%s7 + $0x13c] sm:$0xff]
  %v798 = vld [vmem:[%s7 + $0x144] sm:$0xff]
  %v799 = vld [vmem:[%s7 + $0x14c] sm:$0xf]
  %v800 = vld [vmem:[%s7 + $0x150] sm:$0xff]
  %v801 = vld [vmem:[%s7 + $0x158] sm:$0xff]
  %v802 = vld [vmem:[%s7 + $0x160] sm:$0xff]
  %v803 = vld [vmem:[%s7 + $0x168] sm:$0xf]
  %v804 = vld [vmem:[%s7 + $0x16c] sm:$0xff]
  %v805 = vld [vmem:[%s7 + $0x174] sm:$0xff]
  %v806 = vld [vmem:[%s7 + $0x17c] sm:$0xff]
  %v807 = vld [vmem:[%s7 + $0x184] sm:$0xf]
  %v808 = vld [vmem:[%s7 + $0x188] sm:$0xff]
  %v809 = vld [vmem:[%s7 + $0x190] sm:$0xff]
  %v810 = vld [vmem:[%s7 + $0x198] sm:$0xff]
  %v811 = vld [vmem:[%s7 + $0x1a0] sm:$0xf]
  %v812 = vld [vmem:[%s7 + $0x1a4] sm:$0xff]
  %v813 = vld [vmem:[%s7 + $0x1ac] sm:$0xff]
  %v814 = vld [vmem:[%s7 + $0x1b4] sm:$0xff]
  %v815 = vld [vmem:[%s7 + $0x1bc] sm:$0xf]
  %v816 = vld [vmem:[%s7 + $0x1c0] sm:$0xff]
  %v817 = vld [vmem:[%s7 + $0x1c8] sm:$0xff]
  %v818 = vld [vmem:[%s7 + $0x1d0] sm:$0xff]
  %v819 = vld [vmem:[%s7 + $0x1d8] sm:$0xf]
  %v820 = vld [vmem:[%s7 + $0x1dc] sm:$0xff]
  %v821 = vld [vmem:[%s7 + $0x1e4] sm:$0xff]
  %v822 = vld [vmem:[%s7 + $0x1ec] sm:$0xff]
  %v823 = vld [vmem:[%s7 + $0x1f4] sm:$0xf]
  %v824 = vld [vmem:[%s7 + $0x1f8] sm:$0xff]
  %v825 = vld [vmem:[%s7 + $0x200] sm:$0xff]
  %v826 = vld [vmem:[%s7 + $0x208] sm:$0xff]
  %v827 = vld [vmem:[%s7 + $0x210] sm:$0xf]
  %v828 = vld [vmem:[%s7 + $0x214] sm:$0xff]
  %v829 = vld [vmem:[%s7 + $0x21c] sm:$0xff]
  %v830 = vld [vmem:[%s7 + $0x224] sm:$0xff]
  %v831 = vld [vmem:[%s7 + $0x22c] sm:$0xf]
  %v832 = vld [vmem:[%s7 + $0x230] sm:$0xff]
  %v833 = vld [vmem:[%s7 + $0x238] sm:$0xff]
  %v834 = vld [vmem:[%s7 + $0x240] sm:$0xff]
  %v835 = vld [vmem:[%s7 + $0x248] sm:$0xf]
  %v836 = vld [vmem:[%s7 + $0x24c] sm:$0xff]
  %v837 = vld [vmem:[%s7 + $0x254] sm:$0xff]
  %v838 = vld [vmem:[%s7 + $0x25c] sm:$0xff]
  %v839 = vld [vmem:[%s7 + $0x264] sm:$0xf]
  %v840 = vld [vmem:[%s7 + $0x268] sm:$0xff]
  %v841 = vld [vmem:[%s7 + $0x270] sm:$0xff]
  %v842 = vld [vmem:[%s7 + $0x278] sm:$0xff]
  %v843 = vld [vmem:[%s7 + $0x280] sm:$0xf]
  %v844 = vld [vmem:[%s7 + $0x284] sm:$0xff]
  %v845 = vld [vmem:[%s7 + $0x28c] sm:$0xff]
  %v846 = vld [vmem:[%s7 + $0x294] sm:$0xff]
  %v847 = vld [vmem:[%s7 + $0x29c] sm:$0xf]
  %v848 = vld [vmem:[%s7 + $0x2a0] sm:$0xff]
  %v849 = vld [vmem:[%s7 + $0x2a8] sm:$0xff]
  %v850 = vld [vmem:[%s7 + $0x2b0] sm:$0xff]
  %v851 = vld [vmem:[%s7 + $0x2b8] sm:$0xf]
  %v852 = vld [vmem:[%s7 + $0x2bc] sm:$0xff]
  %v853 = vld [vmem:[%s7 + $0x2c4] sm:$0xff]
  %v854 = vld [vmem:[%s7 + $0x2cc] sm:$0xff]
  %v855 = vld [vmem:[%s7 + $0x2d4] sm:$0xf]
  %v856 = vld [vmem:[%s7 + $0x2d8] sm:$0xff]
  %v857 = vld [vmem:[%s7 + $0x2e0] sm:$0xff]
  %v858 = vld [vmem:[%s7 + $0x2e8] sm:$0xff]
  %v859 = vld [vmem:[%s7 + $0x2f0] sm:$0xf]
  %v860 = vld [vmem:[%s7 + $0x2f4] sm:$0xff]
  %v861 = vld [vmem:[%s7 + $0x2fc] sm:$0xff]
  %v862 = vld [vmem:[%s7 + $0x304] sm:$0xff]
  %v863 = vld [vmem:[%s7 + $0x30c] sm:$0xf]
  %v864 = vld [vmem:[%s7 + $0x310] sm:$0xff]
  %v865 = vld [vmem:[%s7 + $0x318] sm:$0xff]
  %v866 = vld [vmem:[%s7 + $0x320] sm:$0xff]
  %v867 = vld [vmem:[%s7 + $0x328] sm:$0xf]
  %v868 = vld [vmem:[%s7 + $0x32c] sm:$0xff]
  %v869 = vld [vmem:[%s7 + $0x334] sm:$0xff]
  %v870 = vld [vmem:[%s7 + $0x33c] sm:$0xff]
  %v871 = vld [vmem:[%s7 + $0x344] sm:$0xf]
  %v872 = vld [vmem:[%s7 + $0x348] sm:$0xff]
  %v873 = vld [vmem:[%s7 + $0x350] sm:$0xff]
  %v874 = vld [vmem:[%s7 + $0x358] sm:$0xff]
  %v875 = vld [vmem:[%s7 + $0x360] sm:$0xf]
  %v876 = vld [vmem:[%s7 + $0x364] sm:$0xff]
  %v877 = vld [vmem:[%s7 + $0x36c] sm:$0xff]
  %v878 = vld [vmem:[%s7 + $0x374] sm:$0xff]
  %v879 = vld [vmem:[%s7 + $0x37c] sm:$0xf]
  %v880 = vld [vmem:[%s7 + $0x380] sm:$0xff]
  %v881 = vld [vmem:[%s7 + $0x388] sm:$0xff]
  %v882 = vld [vmem:[%s7 + $0x390] sm:$0xff]
  %v883 = vld [vmem:[%s7 + $0x398] sm:$0xf]
  %v884 = vld [vmem:[%s7 + $0x39c] sm:$0xff]
  %v885 = vld [vmem:[%s7 + $0x3a4] sm:$0xff]
  %v886 = vld [vmem:[%s7 + $0x3ac] sm:$0xff]
  %v887 = vld [vmem:[%s7 + $0x3b4] sm:$0xf]
  %v888 = vld [vmem:[%s7 + $0x3b8] sm:$0xff]
  %v889 = vld [vmem:[%s7 + $0x3c0] sm:$0xff]
  %v890 = vld [vmem:[%s7 + $0x3c8] sm:$0xff]
  %v891 = vld [vmem:[%s7 + $0x3d0] sm:$0xf]
  %v892 = vld [vmem:[%s7 + $0x3d4] sm:$0xff]
  %v893 = vld [vmem:[%s7 + $0x3dc] sm:$0xff]
  %v894 = vld [vmem:[%s7 + $0x3e4] sm:$0xff]
  %v895 = vld [vmem:[%s7 + $0x3ec] sm:$0xf]
  %v896 = vld [vmem:[%s7 + $0x3f0] sm:$0xff]
  %v897 = vld [vmem:[%s7 + $0x3f8] sm:$0xff]
  %v898 = vld [vmem:[%s7 + $0x400] sm:$0xff]
  %v899 = vld [vmem:[%s7 + $0x408] sm:$0xf]
  %v900 = vld [vmem:[%s7 + $0x40c] sm:$0xff]
  %v901 = vld [vmem:[%s7 + $0x414] sm:$0xff]
  %v902 = vld [vmem:[%s7 + $0x41c] sm:$0xff]
  %v903 = vld [vmem:[%s7 + $0x424] sm:$0xf]
  %v904 = vld [vmem:[%s7 + $0x428] sm:$0xff]
  %v905 = vld [vmem:[%s7 + $0x430] sm:$0xff]
  %v906 = vld [vmem:[%s7 + $0x438] sm:$0xff]
  %v907 = vld [vmem:[%s7 + $0x440] sm:$0xf]
  %v908 = vld [vmem:[%s7 + $0x444] sm:$0xff]
  %v909 = vld [vmem:[%s7 + $0x44c] sm:$0xff]
  %v910 = vld [vmem:[%s7 + $0x454] sm:$0xff]
  %v911 = vld [vmem:[%s7 + $0x45c] sm:$0xf]
  %v912 = vld [vmem:[%s7 + $0x460] sm:$0xff]
  %v913 = vld [vmem:[%s7 + $0x468] sm:$0xff]
  %v914 = vld [vmem:[%s7 + $0x470] sm:$0xff]
  %v915 = vld [vmem:[%s7 + $0x478] sm:$0xf]
  %v916 = vld [vmem:[%s7 + $0x47c] sm:$0xff]
  %v917 = vld [vmem:[%s7 + $0x484] sm:$0xff]
  %v918 = vld [vmem:[%s7 + $0x48c] sm:$0xff]
  %v919 = vld [vmem:[%s7 + $0x494] sm:$0xf]
  %v920 = vld [vmem:[%s7 + $0x498] sm:$0xff]
  %v921 = vld [vmem:[%s7 + $0x4a0] sm:$0xff]
  %v922 = vld [vmem:[%s7 + $0x4a8] sm:$0xff]
  %v923 = vld [vmem:[%s7 + $0x4b0] sm:$0xf]
  %v924 = vld [vmem:[%s7 + $0x4b4] sm:$0xff]
  %v925 = vld [vmem:[%s7 + $0x4bc] sm:$0xff]
  %v926 = vld [vmem:[%s7 + $0x4c4] sm:$0xff]
  %v927 = vld [vmem:[%s7 + $0x4cc] sm:$0xf]
  %v928 = vld [vmem:[%s7 + $0x4d0] sm:$0xff]
  %v929 = vld [vmem:[%s7 + $0x4d8] sm:$0xff]
  %v930 = vld [vmem:[%s7 + $0x4e0] sm:$0xff]
  %v931 = vld [vmem:[%s7 + $0x4e8] sm:$0xf]
  %v932 = vld [vmem:[%s7 + $0x4ec] sm:$0xff]
  %v933 = vld [vmem:[%s7 + $0x4f4] sm:$0xff]
  %v934 = vld [vmem:[%s7 + $0x4fc] sm:$0xff]
  %v935 = vld [vmem:[%s7 + $0x504] sm:$0xf]
  %v936 = vld [vmem:[%s7 + $0x508] sm:$0xff]
  %v937 = vld [vmem:[%s7 + $0x510] sm:$0xff]
  %v938 = vld [vmem:[%s7 + $0x518] sm:$0xff]
  %v939 = vld [vmem:[%s7 + $0x520] sm:$0xf]
  %v940 = vld [vmem:[%s7 + $0x524] sm:$0xff]
  %v941 = vld [vmem:[%s7 + $0x52c] sm:$0xff]
  %v942 = vld [vmem:[%s7 + $0x534] sm:$0xff]
  %v943 = vld [vmem:[%s7 + $0x53c] sm:$0xf]
  %v944 = vld [vmem:[%s7 + $0x540] sm:$0xff]
  %v945 = vld [vmem:[%s7 + $0x548] sm:$0xff]
  %v946 = vld [vmem:[%s7 + $0x550] sm:$0xff]
  %v947 = vld [vmem:[%s7 + $0x558] sm:$0xf]
  %v948 = vld [vmem:[%s7 + $0x55c] sm:$0xff]
  %v949 = vld [vmem:[%s7 + $0x564] sm:$0xff]
  %v950 = vld [vmem:[%s7 + $0x56c] sm:$0xff]
  %v951 = vld [vmem:[%s7 + $0x574] sm:$0xf]
  %v952 = vld [vmem:[%s7 + $0x578] sm:$0xff]
  %v953 = vld [vmem:[%s7 + $0x580] sm:$0xff]
  %v954 = vld [vmem:[%s7 + $0x588] sm:$0xff]
  %v955 = vld [vmem:[%s7 + $0x590] sm:$0xf]
  %v956 = vld [vmem:[%s7 + $0x594] sm:$0xff]
  %v957 = vld [vmem:[%s7 + $0x59c] sm:$0xff]
  %v958 = vld [vmem:[%s7 + $0x5a4] sm:$0xff]
  %v959 = vld [vmem:[%s7 + $0x5ac] sm:$0xf]
  %v960 = vld [vmem:[%s7 + $0x5b0] sm:$0xff]
  %v961 = vld [vmem:[%s7 + $0x5b8] sm:$0xff]
  %v962 = vld [vmem:[%s7 + $0x5c0] sm:$0xff]
  %v963 = vld [vmem:[%s7 + $0x5c8] sm:$0xf]
  %v964 = vld [vmem:[%s7 + $0x5cc] sm:$0xff]
  %v965 = vld [vmem:[%s7 + $0x5d4] sm:$0xff]
  %v966 = vld [vmem:[%s7 + $0x5dc] sm:$0xff]
  %v967 = vld [vmem:[%s7 + $0x5e4] sm:$0xf]
  %v968 = vld [vmem:[%s7 + $0x5e8] sm:$0xff]
  %v969 = vld [vmem:[%s7 + $0x5f0] sm:$0xff]
  %v970 = vld [vmem:[%s7 + $0x5f8] sm:$0xff]
  %v971 = vld [vmem:[%s7 + $0x600] sm:$0xf]
  %v972 = vld [vmem:[%s7 + $0x604] sm:$0xff]
  %v973 = vld [vmem:[%s7 + $0x60c] sm:$0xff]
  %v974 = vld [vmem:[%s7 + $0x614] sm:$0xff]
  %v975 = vld [vmem:[%s7 + $0x61c] sm:$0xf]
  %v976 = vld [vmem:[%s7 + $0x620] sm:$0xff]
  %v977 = vld [vmem:[%s7 + $0x628] sm:$0xff]
  %v978 = vld [vmem:[%s7 + $0x630] sm:$0xff]
  %v979 = vld [vmem:[%s7 + $0x638] sm:$0xf]
  %v980 = vld [vmem:[%s7 + $0x63c] sm:$0xff]
  %v981 = vld [vmem:[%s7 + $0x644] sm:$0xff]
  %v982 = vld [vmem:[%s7 + $0x64c] sm:$0xff]
  %v983 = vld [vmem:[%s7 + $0x654] sm:$0xf]
  %v984 = vld [vmem:[%s7 + $0x658] sm:$0xff]
  %v985 = vld [vmem:[%s7 + $0x660] sm:$0xff]
  %v986 = vld [vmem:[%s7 + $0x668] sm:$0xff]
  %v987 = vld [vmem:[%s7 + $0x670] sm:$0xf]
  %v988 = vld [vmem:[%s7 + $0x674] sm:$0xff]
  %v989 = vld [vmem:[%s7 + $0x67c] sm:$0xff]
  %v990 = vld [vmem:[%s7 + $0x684] sm:$0xff]
  %v991 = vld [vmem:[%s7 + $0x68c] sm:$0xf]
  %v992 = vld [vmem:[%s7 + $0x690] sm:$0xff]
  %v993 = vld [vmem:[%s7 + $0x698] sm:$0xff]
  %v994 = vld [vmem:[%s7 + $0x6a0] sm:$0xff]
  %v995 = vld [vmem:[%s7 + $0x6a8] sm:$0xf]
  %v996 = vld [vmem:[%s7 + $0x6ac] sm:$0xff]
  %v997 = vld [vmem:[%s7 + $0x6b4] sm:$0xff]
  %v998 = vld [vmem:[%s7 + $0x6bc] sm:$0xff]
  %v999 = vld [vmem:[%s7 + $0x6c4] sm:$0xf]
  %v1000 = vld [vmem:[%s7 + $0x6c8] sm:$0xff]
  %v1001 = vld [vmem:[%s7 + $0x6d0] sm:$0xff]
  %v1002 = vld [vmem:[%s7 + $0x6d8] sm:$0xff]
  %v1003 = vld [vmem:[%s7 + $0x6e0] sm:$0xf]
  %v1004 = vld [vmem:[%s7 + $0x6e4] sm:$0xff]
  %v1005 = vld [vmem:[%s7 + $0x6ec] sm:$0xff]
  %v1006 = vld [vmem:[%s7 + $0x6f4] sm:$0xff]
  %v1007 = vld [vmem:[%s7 + $0x6fc] sm:$0xf]
  %v1008 = vld [vmem:[%s8] sm:$0x7f]
  %v1010 = vperm.slane %v1008, 0
  %v1011 = vperm.slane %v1008, 1
  %v1012 = vperm.slane %v1008, 2
  %v1013 = vperm.slane %v1008, 3
  %v1014 = vperm.slane %v1008, 4
  %v1015 = vperm.slane %v1008, 5
  %v1016 = vperm.slane %v1008, 6
  %v1280 = vunpack.c.l.b16 %v752
  %v1281 = vunpack.c.h.b16 %v752
  %v1282 = vunpack.c.l.b16 %v753
  %v1283 = vunpack.c.h.b16 %v753
  %v1284 = vunpack.c.l.b16 %v754
  %v1285 = vunpack.c.h.b16 %v754
  %v1286 = vunpack.c.l.b16 %v755
  %v1287 = vunpack.c.l.b16 %v756
  %v1288 = vunpack.c.h.b16 %v756
  %v1289 = vunpack.c.l.b16 %v757
  %v1290 = vunpack.c.h.b16 %v757
  %v1291 = vunpack.c.l.b16 %v758
  %v1292 = vunpack.c.h.b16 %v758
  %v1293 = vunpack.c.l.b16 %v759
  %v1294 = vunpack.c.l.b16 %v760
  %v1295 = vunpack.c.h.b16 %v760
  %v1296 = vunpack.c.l.b16 %v761
  %v1297 = vunpack.c.h.b16 %v761
  %v1298 = vunpack.c.l.b16 %v762
  %v1299 = vunpack.c.h.b16 %v762
  %v1300 = vunpack.c.l.b16 %v763
  %v1301 = vunpack.c.l.b16 %v764
  %v1302 = vunpack.c.h.b16 %v764
  %v1303 = vunpack.c.l.b16 %v765
  %v1304 = vunpack.c.h.b16 %v765
  %v1305 = vunpack.c.l.b16 %v766
  %v1306 = vunpack.c.h.b16 %v766
  %v1307 = vunpack.c.l.b16 %v767
  %v1308 = vunpack.c.l.b16 %v768
  %v1309 = vunpack.c.h.b16 %v768
  %v1310 = vunpack.c.l.b16 %v769
  %v1311 = vunpack.c.h.b16 %v769
  %v1312 = vunpack.c.l.b16 %v770
  %v1313 = vunpack.c.h.b16 %v770
  %v1314 = vunpack.c.l.b16 %v771
  %v1315 = vunpack.c.l.b16 %v772
  %v1316 = vunpack.c.h.b16 %v772
  %v1317 = vunpack.c.l.b16 %v773
  %v1318 = vunpack.c.h.b16 %v773
  %v1319 = vunpack.c.l.b16 %v774
  %v1320 = vunpack.c.h.b16 %v774
  %v1321 = vunpack.c.l.b16 %v775
  %v1322 = vunpack.c.l.b16 %v776
  %v1323 = vunpack.c.h.b16 %v776
  %v1324 = vunpack.c.l.b16 %v777
  %v1325 = vunpack.c.h.b16 %v777
  %v1326 = vunpack.c.l.b16 %v778
  %v1327 = vunpack.c.h.b16 %v778
  %v1328 = vunpack.c.l.b16 %v779
  %v1329 = vunpack.c.l.b16 %v780
  %v1330 = vunpack.c.h.b16 %v780
  %v1331 = vunpack.c.l.b16 %v781
  %v1332 = vunpack.c.h.b16 %v781
  %v1333 = vunpack.c.l.b16 %v782
  %v1334 = vunpack.c.h.b16 %v782
  %v1335 = vunpack.c.l.b16 %v783
  %v1336 = vunpack.c.l.b16 %v784
  %v1337 = vunpack.c.h.b16 %v784
  %v1338 = vunpack.c.l.b16 %v785
  %v1339 = vunpack.c.h.b16 %v785
  %v1340 = vunpack.c.l.b16 %v786
  %v1341 = vunpack.c.h.b16 %v786
  %v1342 = vunpack.c.l.b16 %v787
  %v1343 = vunpack.c.l.b16 %v788
  %v1344 = vunpack.c.h.b16 %v788
  %v1345 = vunpack.c.l.b16 %v789
  %v1346 = vunpack.c.h.b16 %v789
  %v1347 = vunpack.c.l.b16 %v790
  %v1348 = vunpack.c.h.b16 %v790
  %v1349 = vunpack.c.l.b16 %v791
  %v1350 = vunpack.c.l.b16 %v792
  %v1351 = vunpack.c.h.b16 %v792
  %v1352 = vunpack.c.l.b16 %v793
  %v1353 = vunpack.c.h.b16 %v793
  %v1354 = vunpack.c.l.b16 %v794
  %v1355 = vunpack.c.h.b16 %v794
  %v1356 = vunpack.c.l.b16 %v795
  %v1357 = vunpack.c.l.b16 %v796
  %v1358 = vunpack.c.h.b16 %v796
  %v1359 = vunpack.c.l.b16 %v797
  %v1360 = vunpack.c.h.b16 %v797
  %v1361 = vunpack.c.l.b16 %v798
  %v1362 = vunpack.c.h.b16 %v798
  %v1363 = vunpack.c.l.b16 %v799
  %v1364 = vunpack.c.l.b16 %v800
  %v1365 = vunpack.c.h.b16 %v800
  %v1366 = vunpack.c.l.b16 %v801
  %v1367 = vunpack.c.h.b16 %v801
  %v1368 = vunpack.c.l.b16 %v802
  %v1369 = vunpack.c.h.b16 %v802
  %v1370 = vunpack.c.l.b16 %v803
  %v1371 = vunpack.c.l.b16 %v804
  %v1372 = vunpack.c.h.b16 %v804
  %v1373 = vunpack.c.l.b16 %v805
  %v1374 = vunpack.c.h.b16 %v805
  %v1375 = vunpack.c.l.b16 %v806
  %v1376 = vunpack.c.h.b16 %v806
  %v1377 = vunpack.c.l.b16 %v807
  %v1378 = vunpack.c.l.b16 %v808
  %v1379 = vunpack.c.h.b16 %v808
  %v1380 = vunpack.c.l.b16 %v809
  %v1381 = vunpack.c.h.b16 %v809
  %v1382 = vunpack.c.l.b16 %v810
  %v1383 = vunpack.c.h.b16 %v810
  %v1384 = vunpack.c.l.b16 %v811
  %v1385 = vunpack.c.l.b16 %v812
  %v1386 = vunpack.c.h.b16 %v812
  %v1387 = vunpack.c.l.b16 %v813
  %v1388 = vunpack.c.h.b16 %v813
  %v1389 = vunpack.c.l.b16 %v814
  %v1390 = vunpack.c.h.b16 %v814
  %v1391 = vunpack.c.l.b16 %v815
  %v1392 = vunpack.c.l.b16 %v816
  %v1393 = vunpack.c.h.b16 %v816
  %v1394 = vunpack.c.l.b16 %v817
  %v1395 = vunpack.c.h.b16 %v817
  %v1396 = vunpack.c.l.b16 %v818
  %v1397 = vunpack.c.h.b16 %v818
  %v1398 = vunpack.c.l.b16 %v819
  %v1399 = vunpack.c.l.b16 %v820
  %v1400 = vunpack.c.h.b16 %v820
  %v1401 = vunpack.c.l.b16 %v821
  %v1402 = vunpack.c.h.b16 %v821
  %v1403 = vunpack.c.l.b16 %v822
  %v1404 = vunpack.c.h.b16 %v822
  %v1405 = vunpack.c.l.b16 %v823
  %v1406 = vunpack.c.l.b16 %v824
  %v1407 = vunpack.c.h.b16 %v824
  %v1408 = vunpack.c.l.b16 %v825
  %v1409 = vunpack.c.h.b16 %v825
  %v1410 = vunpack.c.l.b16 %v826
  %v1411 = vunpack.c.h.b16 %v826
  %v1412 = vunpack.c.l.b16 %v827
  %v1413 = vunpack.c.l.b16 %v828
  %v1414 = vunpack.c.h.b16 %v828
  %v1415 = vunpack.c.l.b16 %v829
  %v1416 = vunpack.c.h.b16 %v829
  %v1417 = vunpack.c.l.b16 %v830
  %v1418 = vunpack.c.h.b16 %v830
  %v1419 = vunpack.c.l.b16 %v831
  %v1420 = vunpack.c.l.b16 %v832
  %v1421 = vunpack.c.h.b16 %v832
  %v1422 = vunpack.c.l.b16 %v833
  %v1423 = vunpack.c.h.b16 %v833
  %v1424 = vunpack.c.l.b16 %v834
  %v1425 = vunpack.c.h.b16 %v834
  %v1426 = vunpack.c.l.b16 %v835
  %v1427 = vunpack.c.l.b16 %v836
  %v1428 = vunpack.c.h.b16 %v836
  %v1429 = vunpack.c.l.b16 %v837
  %v1430 = vunpack.c.h.b16 %v837
  %v1431 = vunpack.c.l.b16 %v838
  %v1432 = vunpack.c.h.b16 %v838
  %v1433 = vunpack.c.l.b16 %v839
  %v1434 = vunpack.c.l.b16 %v840
  %v1435 = vunpack.c.h.b16 %v840
  %v1436 = vunpack.c.l.b16 %v841
  %v1437 = vunpack.c.h.b16 %v841
  %v1438 = vunpack.c.l.b16 %v842
  %v1439 = vunpack.c.h.b16 %v842
  %v1440 = vunpack.c.l.b16 %v843
  %v1441 = vunpack.c.l.b16 %v844
  %v1442 = vunpack.c.h.b16 %v844
  %v1443 = vunpack.c.l.b16 %v845
  %v1444 = vunpack.c.h.b16 %v845
  %v1445 = vunpack.c.l.b16 %v846
  %v1446 = vunpack.c.h.b16 %v846
  %v1447 = vunpack.c.l.b16 %v847
  %v1448 = vunpack.c.l.b16 %v848
  %v1449 = vunpack.c.h.b16 %v848
  %v1450 = vunpack.c.l.b16 %v849
  %v1451 = vunpack.c.h.b16 %v849
  %v1452 = vunpack.c.l.b16 %v850
  %v1453 = vunpack.c.h.b16 %v850
  %v1454 = vunpack.c.l.b16 %v851
  %v1455 = vunpack.c.l.b16 %v852
  %v1456 = vunpack.c.h.b16 %v852
  %v1457 = vunpack.c.l.b16 %v853
  %v1458 = vunpack.c.h.b16 %v853
  %v1459 = vunpack.c.l.b16 %v854
  %v1460 = vunpack.c.h.b16 %v854
  %v1461 = vunpack.c.l.b16 %v855
  %v1462 = vunpack.c.l.b16 %v856
  %v1463 = vunpack.c.h.b16 %v856
  %v1464 = vunpack.c.l.b16 %v857
  %v1465 = vunpack.c.h.b16 %v857
  %v1466 = vunpack.c.l.b16 %v858
  %v1467 = vunpack.c.h.b16 %v858
  %v1468 = vunpack.c.l.b16 %v859
  %v1469 = vunpack.c.l.b16 %v860
  %v1470 = vunpack.c.h.b16 %v860
  %v1471 = vunpack.c.l.b16 %v861
  %v1472 = vunpack.c.h.b16 %v861
  %v1473 = vunpack.c.l.b16 %v862
  %v1474 = vunpack.c.h.b16 %v862
  %v1475 = vunpack.c.l.b16 %v863
  %v1476 = vunpack.c.l.b16 %v864
  %v1477 = vunpack.c.h.b16 %v864
  %v1478 = vunpack.c.l.b16 %v865
  %v1479 = vunpack.c.h.b16 %v865
  %v1480 = vunpack.c.l.b16 %v866
  %v1481 = vunpack.c.h.b16 %v866
  %v1482 = vunpack.c.l.b16 %v867
  %v1483 = vunpack.c.l.b16 %v868
  %v1484 = vunpack.c.h.b16 %v868
  %v1485 = vunpack.c.l.b16 %v869
  %v1486 = vunpack.c.h.b16 %v869
  %v1487 = vunpack.c.l.b16 %v870
  %v1488 = vunpack.c.h.b16 %v870
  %v1489 = vunpack.c.l.b16 %v871
  %v1490 = vunpack.c.l.b16 %v872
  %v1491 = vunpack.c.h.b16 %v872
  %v1492 = vunpack.c.l.b16 %v873
  %v1493 = vunpack.c.h.b16 %v873
  %v1494 = vunpack.c.l.b16 %v874
  %v1495 = vunpack.c.h.b16 %v874
  %v1496 = vunpack.c.l.b16 %v875
  %v1497 = vunpack.c.l.b16 %v876
  %v1498 = vunpack.c.h.b16 %v876
  %v1499 = vunpack.c.l.b16 %v877
  %v1500 = vunpack.c.h.b16 %v877
  %v1501 = vunpack.c.l.b16 %v878
  %v1502 = vunpack.c.h.b16 %v878
  %v1503 = vunpack.c.l.b16 %v879
  %v1504 = vunpack.c.l.b16 %v880
  %v1505 = vunpack.c.h.b16 %v880
  %v1506 = vunpack.c.l.b16 %v881
  %v1507 = vunpack.c.h.b16 %v881
  %v1508 = vunpack.c.l.b16 %v882
  %v1509 = vunpack.c.h.b16 %v882
  %v1510 = vunpack.c.l.b16 %v883
  %v1511 = vunpack.c.l.b16 %v884
  %v1512 = vunpack.c.h.b16 %v884
  %v1513 = vunpack.c.l.b16 %v885
  %v1514 = vunpack.c.h.b16 %v885
  %v1515 = vunpack.c.l.b16 %v886
  %v1516 = vunpack.c.h.b16 %v886
  %v1517 = vunpack.c.l.b16 %v887
  %v1518 = vunpack.c.l.b16 %v888
  %v1519 = vunpack.c.h.b16 %v888
  %v1520 = vunpack.c.l.b16 %v889
  %v1521 = vunpack.c.h.b16 %v889
  %v1522 = vunpack.c.l.b16 %v890
  %v1523 = vunpack.c.h.b16 %v890
  %v1524 = vunpack.c.l.b16 %v891
  %v1525 = vunpack.c.l.b16 %v892
  %v1526 = vunpack.c.h.b16 %v892
  %v1527 = vunpack.c.l.b16 %v893
  %v1528 = vunpack.c.h.b16 %v893
  %v1529 = vunpack.c.l.b16 %v894
  %v1530 = vunpack.c.h.b16 %v894
  %v1531 = vunpack.c.l.b16 %v895
  %v1532 = vunpack.c.l.b16 %v896
  %v1533 = vunpack.c.h.b16 %v896
  %v1534 = vunpack.c.l.b16 %v897
  %v1535 = vunpack.c.h.b16 %v897
  %v1536 = vunpack.c.l.b16 %v898
  %v1537 = vunpack.c.h.b16 %v898
  %v1538 = vunpack.c.l.b16 %v899
  %v1539 = vunpack.c.l.b16 %v900
  %v1540 = vunpack.c.h.b16 %v900
  %v1541 = vunpack.c.l.b16 %v901
  %v1542 = vunpack.c.h.b16 %v901
  %v1543 = vunpack.c.l.b16 %v902
  %v1544 = vunpack.c.h.b16 %v902
  %v1545 = vunpack.c.l.b16 %v903
  %v1546 = vunpack.c.l.b16 %v904
  %v1547 = vunpack.c.h.b16 %v904
  %v1548 = vunpack.c.l.b16 %v905
  %v1549 = vunpack.c.h.b16 %v905
  %v1550 = vunpack.c.l.b16 %v906
  %v1551 = vunpack.c.h.b16 %v906
  %v1552 = vunpack.c.l.b16 %v907
  %v1553 = vunpack.c.l.b16 %v908
  %v1554 = vunpack.c.h.b16 %v908
  %v1555 = vunpack.c.l.b16 %v909
  %v1556 = vunpack.c.h.b16 %v909
  %v1557 = vunpack.c.l.b16 %v910
  %v1558 = vunpack.c.h.b16 %v910
  %v1559 = vunpack.c.l.b16 %v911
  %v1560 = vunpack.c.l.b16 %v912
  %v1561 = vunpack.c.h.b16 %v912
  %v1562 = vunpack.c.l.b16 %v913
  %v1563 = vunpack.c.h.b16 %v913
  %v1564 = vunpack.c.l.b16 %v914
  %v1565 = vunpack.c.h.b16 %v914
  %v1566 = vunpack.c.l.b16 %v915
  %v1567 = vunpack.c.l.b16 %v916
  %v1568 = vunpack.c.h.b16 %v916
  %v1569 = vunpack.c.l.b16 %v917
  %v1570 = vunpack.c.h.b16 %v917
  %v1571 = vunpack.c.l.b16 %v918
  %v1572 = vunpack.c.h.b16 %v918
  %v1573 = vunpack.c.l.b16 %v919
  %v1574 = vunpack.c.l.b16 %v920
  %v1575 = vunpack.c.h.b16 %v920
  %v1576 = vunpack.c.l.b16 %v921
  %v1577 = vunpack.c.h.b16 %v921
  %v1578 = vunpack.c.l.b16 %v922
  %v1579 = vunpack.c.h.b16 %v922
  %v1580 = vunpack.c.l.b16 %v923
  %v1581 = vunpack.c.l.b16 %v924
  %v1582 = vunpack.c.h.b16 %v924
  %v1583 = vunpack.c.l.b16 %v925
  %v1584 = vunpack.c.h.b16 %v925
  %v1585 = vunpack.c.l.b16 %v926
  %v1586 = vunpack.c.h.b16 %v926
  %v1587 = vunpack.c.l.b16 %v927
  %v1588 = vunpack.c.l.b16 %v928
  %v1589 = vunpack.c.h.b16 %v928
  %v1590 = vunpack.c.l.b16 %v929
  %v1591 = vunpack.c.h.b16 %v929
  %v1592 = vunpack.c.l.b16 %v930
  %v1593 = vunpack.c.h.b16 %v930
  %v1594 = vunpack.c.l.b16 %v931
  %v1595 = vunpack.c.l.b16 %v932
  %v1596 = vunpack.c.h.b16 %v932
  %v1597 = vunpack.c.l.b16 %v933
  %v1598 = vunpack.c.h.b16 %v933
  %v1599 = vunpack.c.l.b16 %v934
  %v1600 = vunpack.c.h.b16 %v934
  %v1601 = vunpack.c.l.b16 %v935
  %v1602 = vunpack.c.l.b16 %v936
  %v1603 = vunpack.c.h.b16 %v936
  %v1604 = vunpack.c.l.b16 %v937
  %v1605 = vunpack.c.h.b16 %v937
  %v1606 = vunpack.c.l.b16 %v938
  %v1607 = vunpack.c.h.b16 %v938
  %v1608 = vunpack.c.l.b16 %v939
  %v1609 = vunpack.c.l.b16 %v940
  %v1610 = vunpack.c.h.b16 %v940
  %v1611 = vunpack.c.l.b16 %v941
  %v1612 = vunpack.c.h.b16 %v941
  %v1613 = vunpack.c.l.b16 %v942
  %v1614 = vunpack.c.h.b16 %v942
  %v1615 = vunpack.c.l.b16 %v943
  %v1616 = vunpack.c.l.b16 %v944
  %v1617 = vunpack.c.h.b16 %v944
  %v1618 = vunpack.c.l.b16 %v945
  %v1619 = vunpack.c.h.b16 %v945
  %v1620 = vunpack.c.l.b16 %v946
  %v1621 = vunpack.c.h.b16 %v946
  %v1622 = vunpack.c.l.b16 %v947
  %v1623 = vunpack.c.l.b16 %v948
  %v1624 = vunpack.c.h.b16 %v948
  %v1625 = vunpack.c.l.b16 %v949
  %v1626 = vunpack.c.h.b16 %v949
  %v1627 = vunpack.c.l.b16 %v950
  %v1628 = vunpack.c.h.b16 %v950
  %v1629 = vunpack.c.l.b16 %v951
  %v1630 = vunpack.c.l.b16 %v952
  %v1631 = vunpack.c.h.b16 %v952
  %v1632 = vunpack.c.l.b16 %v953
  %v1633 = vunpack.c.h.b16 %v953
  %v1634 = vunpack.c.l.b16 %v954
  %v1635 = vunpack.c.h.b16 %v954
  %v1636 = vunpack.c.l.b16 %v955
  %v1637 = vunpack.c.l.b16 %v956
  %v1638 = vunpack.c.h.b16 %v956
  %v1639 = vunpack.c.l.b16 %v957
  %v1640 = vunpack.c.h.b16 %v957
  %v1641 = vunpack.c.l.b16 %v958
  %v1642 = vunpack.c.h.b16 %v958
  %v1643 = vunpack.c.l.b16 %v959
  %v1644 = vunpack.c.l.b16 %v960
  %v1645 = vunpack.c.h.b16 %v960
  %v1646 = vunpack.c.l.b16 %v961
  %v1647 = vunpack.c.h.b16 %v961
  %v1648 = vunpack.c.l.b16 %v962
  %v1649 = vunpack.c.h.b16 %v962
  %v1650 = vunpack.c.l.b16 %v963
  %v1651 = vunpack.c.l.b16 %v964
  %v1652 = vunpack.c.h.b16 %v964
  %v1653 = vunpack.c.l.b16 %v965
  %v1654 = vunpack.c.h.b16 %v965
  %v1655 = vunpack.c.l.b16 %v966
  %v1656 = vunpack.c.h.b16 %v966
  %v1657 = vunpack.c.l.b16 %v967
  %v1658 = vunpack.c.l.b16 %v968
  %v1659 = vunpack.c.h.b16 %v968
  %v1660 = vunpack.c.l.b16 %v969
  %v1661 = vunpack.c.h.b16 %v969
  %v1662 = vunpack.c.l.b16 %v970
  %v1663 = vunpack.c.h.b16 %v970
  %v1664 = vunpack.c.l.b16 %v971
  %v1665 = vunpack.c.l.b16 %v972
  %v1666 = vunpack.c.h.b16 %v972
  %v1667 = vunpack.c.l.b16 %v973
  %v1668 = vunpack.c.h.b16 %v973
  %v1669 = vunpack.c.l.b16 %v974
  %v1670 = vunpack.c.h.b16 %v974
  %v1671 = vunpack.c.l.b16 %v975
  %v1672 = vunpack.c.l.b16 %v976
  %v1673 = vunpack.c.h.b16 %v976
  %v1674 = vunpack.c.l.b16 %v977
  %v1675 = vunpack.c.h.b16 %v977
  %v1676 = vunpack.c.l.b16 %v978
  %v1677 = vunpack.c.h.b16 %v978
  %v1678 = vunpack.c.l.b16 %v979
  %v1679 = vunpack.c.l.b16 %v980
  %v1680 = vunpack.c.h.b16 %v980
  %v1681 = vunpack.c.l.b16 %v981
  %v1682 = vunpack.c.h.b16 %v981
  %v1683 = vunpack.c.l.b16 %v982
  %v1684 = vunpack.c.h.b16 %v982
  %v1685 = vunpack.c.l.b16 %v983
  %v1686 = vunpack.c.l.b16 %v984
  %v1687 = vunpack.c.h.b16 %v984
  %v1688 = vunpack.c.l.b16 %v985
  %v1689 = vunpack.c.h.b16 %v985
  %v1690 = vunpack.c.l.b16 %v986
  %v1691 = vunpack.c.h.b16 %v986
  %v1692 = vunpack.c.l.b16 %v987
  %v1693 = vunpack.c.l.b16 %v988
  %v1694 = vunpack.c.h.b16 %v988
  %v1695 = vunpack.c.l.b16 %v989
  %v1696 = vunpack.c.h.b16 %v989
  %v1697 = vunpack.c.l.b16 %v990
  %v1698 = vunpack.c.h.b16 %v990
  %v1699 = vunpack.c.l.b16 %v991
  %v1700 = vunpack.c.l.b16 %v992
  %v1701 = vunpack.c.h.b16 %v992
  %v1702 = vunpack.c.l.b16 %v993
  %v1703 = vunpack.c.h.b16 %v993
  %v1704 = vunpack.c.l.b16 %v994
  %v1705 = vunpack.c.h.b16 %v994
  %v1706 = vunpack.c.l.b16 %v995
  %v1707 = vunpack.c.l.b16 %v996
  %v1708 = vunpack.c.h.b16 %v996
  %v1709 = vunpack.c.l.b16 %v997
  %v1710 = vunpack.c.h.b16 %v997
  %v1711 = vunpack.c.l.b16 %v998
  %v1712 = vunpack.c.h.b16 %v998
  %v1713 = vunpack.c.l.b16 %v999
  %v1714 = vunpack.c.l.b16 %v1000
  %v1715 = vunpack.c.h.b16 %v1000
  %v1716 = vunpack.c.l.b16 %v1001
  %v1717 = vunpack.c.h.b16 %v1001
  %v1718 = vunpack.c.l.b16 %v1002
  %v1719 = vunpack.c.h.b16 %v1002
  %v1720 = vunpack.c.l.b16 %v1003
  %v1721 = vunpack.c.l.b16 %v1004
  %v1722 = vunpack.c.h.b16 %v1004
  %v1723 = vunpack.c.l.b16 %v1005
  %v1724 = vunpack.c.h.b16 %v1005
  %v1725 = vunpack.c.l.b16 %v1006
  %v1726 = vunpack.c.h.b16 %v1006
  %v1727 = vunpack.c.l.b16 %v1007
  %v1728 = vpack.c.b16 %v1287, %v1280
  %v1729 = vpack.c.b16 %v1288, %v1281
  %v1730 = vpack.c.b16 %v1289, %v1282
  %v1731 = vpack.c.b16 %v1290, %v1283
  %v1732 = vpack.c.b16 %v1291, %v1284
  %v1733 = vpack.c.b16 %v1292, %v1285
  %v1734 = vpack.c.b16 %v1293, %v1286
  %v1735 = vpack.c.b16 %v1301, %v1294
  %v1736 = vpack.c.b16 %v1302, %v1295
  %v1737 = vpack.c.b16 %v1303, %v1296
  %v1738 = vpack.c.b16 %v1304, %v1297
  %v1739 = vpack.c.b16 %v1305, %v1298
  %v1740 = vpack.c.b16 %v1306, %v1299
  %v1741 = vpack.c.b16 %v1307, %v1300
  %v1742 = vpack.c.b16 %v1315, %v1308
  %v1743 = vpack.c.b16 %v1316, %v1309
  %v1744 = vpack.c.b16 %v1317, %v1310
  %v1745 = vpack.c.b16 %v1318, %v1311
  %v1746 = vpack.c.b16 %v1319, %v1312
  %v1747 = vpack.c.b16 %v1320, %v1313
  %v1748 = vpack.c.b16 %v1321, %v1314
  %v1749 = vpack.c.b16 %v1329, %v1322
  %v1750 = vpack.c.b16 %v1330, %v1323
  %v1751 = vpack.c.b16 %v1331, %v1324
  %v1752 = vpack.c.b16 %v1332, %v1325
  %v1753 = vpack.c.b16 %v1333, %v1326
  %v1754 = vpack.c.b16 %v1334, %v1327
  %v1755 = vpack.c.b16 %v1335, %v1328
  %v1756 = vpack.c.b16 %v1343, %v1336
  %v1757 = vpack.c.b16 %v1344, %v1337
  %v1758 = vpack.c.b16 %v1345, %v1338
  %v1759 = vpack.c.b16 %v1346, %v1339
  %v1760 = vpack.c.b16 %v1347, %v1340
  %v1761 = vpack.c.b16 %v1348, %v1341
  %v1762 = vpack.c.b16 %v1349, %v1342
  %v1763 = vpack.c.b16 %v1357, %v1350
  %v1764 = vpack.c.b16 %v1358, %v1351
  %v1765 = vpack.c.b16 %v1359, %v1352
  %v1766 = vpack.c.b16 %v1360, %v1353
  %v1767 = vpack.c.b16 %v1361, %v1354
  %v1768 = vpack.c.b16 %v1362, %v1355
  %v1769 = vpack.c.b16 %v1363, %v1356
  %v1770 = vpack.c.b16 %v1371, %v1364
  %v1771 = vpack.c.b16 %v1372, %v1365
  %v1772 = vpack.c.b16 %v1373, %v1366
  %v1773 = vpack.c.b16 %v1374, %v1367
  %v1774 = vpack.c.b16 %v1375, %v1368
  %v1775 = vpack.c.b16 %v1376, %v1369
  %v1776 = vpack.c.b16 %v1377, %v1370
  %v1777 = vpack.c.b16 %v1385, %v1378
  %v1778 = vpack.c.b16 %v1386, %v1379
  %v1779 = vpack.c.b16 %v1387, %v1380
  %v1780 = vpack.c.b16 %v1388, %v1381
  %v1781 = vpack.c.b16 %v1389, %v1382
  %v1782 = vpack.c.b16 %v1390, %v1383
  %v1783 = vpack.c.b16 %v1391, %v1384
  %v1784 = vpack.c.b16 %v1399, %v1392
  %v1785 = vpack.c.b16 %v1400, %v1393
  %v1786 = vpack.c.b16 %v1401, %v1394
  %v1787 = vpack.c.b16 %v1402, %v1395
  %v1788 = vpack.c.b16 %v1403, %v1396
  %v1789 = vpack.c.b16 %v1404, %v1397
  %v1790 = vpack.c.b16 %v1405, %v1398
  %v1791 = vpack.c.b16 %v1413, %v1406
  %v1792 = vpack.c.b16 %v1414, %v1407
  %v1793 = vpack.c.b16 %v1415, %v1408
  %v1794 = vpack.c.b16 %v1416, %v1409
  %v1795 = vpack.c.b16 %v1417, %v1410
  %v1796 = vpack.c.b16 %v1418, %v1411
  %v1797 = vpack.c.b16 %v1419, %v1412
  %v1798 = vpack.c.b16 %v1427, %v1420
  %v1799 = vpack.c.b16 %v1428, %v1421
  %v1800 = vpack.c.b16 %v1429, %v1422
  %v1801 = vpack.c.b16 %v1430, %v1423
  %v1802 = vpack.c.b16 %v1431, %v1424
  %v1803 = vpack.c.b16 %v1432, %v1425
  %v1804 = vpack.c.b16 %v1433, %v1426
  %v1805 = vpack.c.b16 %v1441, %v1434
  %v1806 = vpack.c.b16 %v1442, %v1435
  %v1807 = vpack.c.b16 %v1443, %v1436
  %v1808 = vpack.c.b16 %v1444, %v1437
  %v1809 = vpack.c.b16 %v1445, %v1438
  %v1810 = vpack.c.b16 %v1446, %v1439
  %v1811 = vpack.c.b16 %v1447, %v1440
  %v1812 = vpack.c.b16 %v1455, %v1448
  %v1813 = vpack.c.b16 %v1456, %v1449
  %v1814 = vpack.c.b16 %v1457, %v1450
  %v1815 = vpack.c.b16 %v1458, %v1451
  %v1816 = vpack.c.b16 %v1459, %v1452
  %v1817 = vpack.c.b16 %v1460, %v1453
  %v1818 = vpack.c.b16 %v1461, %v1454
  %v1819 = vpack.c.b16 %v1469, %v1462
  %v1820 = vpack.c.b16 %v1470, %v1463
  %v1821 = vpack.c.b16 %v1471, %v1464
  %v1822 = vpack.c.b16 %v1472, %v1465
  %v1823 = vpack.c.b16 %v1473, %v1466
  %v1824 = vpack.c.b16 %v1474, %v1467
  %v1825 = vpack.c.b16 %v1475, %v1468
  %v1826 = vpack.c.b16 %v1483, %v1476
  %v1827 = vpack.c.b16 %v1484, %v1477
  %v1828 = vpack.c.b16 %v1485, %v1478
  %v1829 = vpack.c.b16 %v1486, %v1479
  %v1830 = vpack.c.b16 %v1487, %v1480
  %v1831 = vpack.c.b16 %v1488, %v1481
  %v1832 = vpack.c.b16 %v1489, %v1482
  %v1833 = vpack.c.b16 %v1497, %v1490
  %v1834 = vpack.c.b16 %v1498, %v1491
  %v1835 = vpack.c.b16 %v1499, %v1492
  %v1836 = vpack.c.b16 %v1500, %v1493
  %v1837 = vpack.c.b16 %v1501, %v1494
  %v1838 = vpack.c.b16 %v1502, %v1495
  %v1839 = vpack.c.b16 %v1503, %v1496
  %v1840 = vpack.c.b16 %v1511, %v1504
  %v1841 = vpack.c.b16 %v1512, %v1505
  %v1842 = vpack.c.b16 %v1513, %v1506
  %v1843 = vpack.c.b16 %v1514, %v1507
  %v1844 = vpack.c.b16 %v1515, %v1508
  %v1845 = vpack.c.b16 %v1516, %v1509
  %v1846 = vpack.c.b16 %v1517, %v1510
  %v1847 = vpack.c.b16 %v1525, %v1518
  %v1848 = vpack.c.b16 %v1526, %v1519
  %v1849 = vpack.c.b16 %v1527, %v1520
  %v1850 = vpack.c.b16 %v1528, %v1521
  %v1851 = vpack.c.b16 %v1529, %v1522
  %v1852 = vpack.c.b16 %v1530, %v1523
  %v1853 = vpack.c.b16 %v1531, %v1524
  %v1854 = vpack.c.b16 %v1539, %v1532
  %v1855 = vpack.c.b16 %v1540, %v1533
  %v1856 = vpack.c.b16 %v1541, %v1534
  %v1857 = vpack.c.b16 %v1542, %v1535
  %v1858 = vpack.c.b16 %v1543, %v1536
  %v1859 = vpack.c.b16 %v1544, %v1537
  %v1860 = vpack.c.b16 %v1545, %v1538
  %v1861 = vpack.c.b16 %v1553, %v1546
  %v1862 = vpack.c.b16 %v1554, %v1547
  %v1863 = vpack.c.b16 %v1555, %v1548
  %v1864 = vpack.c.b16 %v1556, %v1549
  %v1865 = vpack.c.b16 %v1557, %v1550
  %v1866 = vpack.c.b16 %v1558, %v1551
  %v1867 = vpack.c.b16 %v1559, %v1552
  %v1868 = vpack.c.b16 %v1567, %v1560
  %v1869 = vpack.c.b16 %v1568, %v1561
  %v1870 = vpack.c.b16 %v1569, %v1562
  %v1871 = vpack.c.b16 %v1570, %v1563
  %v1872 = vpack.c.b16 %v1571, %v1564
  %v1873 = vpack.c.b16 %v1572, %v1565
  %v1874 = vpack.c.b16 %v1573, %v1566
  %v1875 = vpack.c.b16 %v1581, %v1574
  %v1876 = vpack.c.b16 %v1582, %v1575
  %v1877 = vpack.c.b16 %v1583, %v1576
  %v1878 = vpack.c.b16 %v1584, %v1577
  %v1879 = vpack.c.b16 %v1585, %v1578
  %v1880 = vpack.c.b16 %v1586, %v1579
  %v1881 = vpack.c.b16 %v1587, %v1580
  %v1882 = vpack.c.b16 %v1595, %v1588
  %v1883 = vpack.c.b16 %v1596, %v1589
  %v1884 = vpack.c.b16 %v1597, %v1590
  %v1885 = vpack.c.b16 %v1598, %v1591
  %v1886 = vpack.c.b16 %v1599, %v1592
  %v1887 = vpack.c.b16 %v1600, %v1593
  %v1888 = vpack.c.b16 %v1601, %v1594
  %v1889 = vpack.c.b16 %v1609, %v1602
  %v1890 = vpack.c.b16 %v1610, %v1603
  %v1891 = vpack.c.b16 %v1611, %v1604
  %v1892 = vpack.c.b16 %v1612, %v1605
  %v1893 = vpack.c.b16 %v1613, %v1606
  %v1894 = vpack.c.b16 %v1614, %v1607
  %v1895 = vpack.c.b16 %v1615, %v1608
  %v1896 = vpack.c.b16 %v1623, %v1616
  %v1897 = vpack.c.b16 %v1624, %v1617
  %v1898 = vpack.c.b16 %v1625, %v1618
  %v1899 = vpack.c.b16 %v1626, %v1619
  %v1900 = vpack.c.b16 %v1627, %v1620
  %v1901 = vpack.c.b16 %v1628, %v1621
  %v1902 = vpack.c.b16 %v1629, %v1622
  %v1903 = vpack.c.b16 %v1637, %v1630
  %v1904 = vpack.c.b16 %v1638, %v1631
  %v1905 = vpack.c.b16 %v1639, %v1632
  %v1906 = vpack.c.b16 %v1640, %v1633
  %v1907 = vpack.c.b16 %v1641, %v1634
  %v1908 = vpack.c.b16 %v1642, %v1635
  %v1909 = vpack.c.b16 %v1643, %v1636
  %v1910 = vpack.c.b16 %v1651, %v1644
  %v1911 = vpack.c.b16 %v1652, %v1645
  %v1912 = vpack.c.b16 %v1653, %v1646
  %v1913 = vpack.c.b16 %v1654, %v1647
  %v1914 = vpack.c.b16 %v1655, %v1648
  %v1915 = vpack.c.b16 %v1656, %v1649
  %v1916 = vpack.c.b16 %v1657, %v1650
  %v1917 = vpack.c.b16 %v1665, %v1658
  %v1918 = vpack.c.b16 %v1666, %v1659
  %v1919 = vpack.c.b16 %v1667, %v1660
  %v1920 = vpack.c.b16 %v1668, %v1661
  %v1921 = vpack.c.b16 %v1669, %v1662
  %v1922 = vpack.c.b16 %v1670, %v1663
  %v1923 = vpack.c.b16 %v1671, %v1664
  %v1924 = vpack.c.b16 %v1679, %v1672
  %v1925 = vpack.c.b16 %v1680, %v1673
  %v1926 = vpack.c.b16 %v1681, %v1674
  %v1927 = vpack.c.b16 %v1682, %v1675
  %v1928 = vpack.c.b16 %v1683, %v1676
  %v1929 = vpack.c.b16 %v1684, %v1677
  %v1930 = vpack.c.b16 %v1685, %v1678
  %v1931 = vpack.c.b16 %v1693, %v1686
  %v1932 = vpack.c.b16 %v1694, %v1687
  %v1933 = vpack.c.b16 %v1695, %v1688
  %v1934 = vpack.c.b16 %v1696, %v1689
  %v1935 = vpack.c.b16 %v1697, %v1690
  %v1936 = vpack.c.b16 %v1698, %v1691
  %v1937 = vpack.c.b16 %v1699, %v1692
  %v1938 = vpack.c.b16 %v1707, %v1700
  %v1939 = vpack.c.b16 %v1708, %v1701
  %v1940 = vpack.c.b16 %v1709, %v1702
  %v1941 = vpack.c.b16 %v1710, %v1703
  %v1942 = vpack.c.b16 %v1711, %v1704
  %v1943 = vpack.c.b16 %v1712, %v1705
  %v1944 = vpack.c.b16 %v1713, %v1706
  %v1945 = vpack.c.b16 %v1721, %v1714
  %v1946 = vpack.c.b16 %v1722, %v1715
  %v1947 = vpack.c.b16 %v1723, %v1716
  %v1948 = vpack.c.b16 %v1724, %v1717
  %v1949 = vpack.c.b16 %v1725, %v1718
  %v1950 = vpack.c.b16 %v1726, %v1719
  %v1951 = vpack.c.b16 %v1727, %v1720
  %2176 = vmatpush.bf16.msra.mxu0 %v1777
  %2177 = vmatpush.bf16.msra.mxu0 %v1770
  %2178 = vmatpush.bf16.msra.mxu0 %v1763
  %2179 = vmatpush.bf16.msra.mxu0 %v1756
  %2180 = vmatpush.bf16.msra.mxu0 %v1749
  %2181 = vmatpush.bf16.msra.mxu0 %v1742
  %2182 = vmatpush.bf16.msra.mxu0 %v1735
  %2183 = vmatpush.bf16.msra.mxu0 %v1728
  %2184 = vmatmul.bf16.gmra.mxu0 %v748
  %v2185 = vpop.f32.mrf.mxu0
  %v2186 = vadd.f32 %v1010, %v2185
  %v2187 = vpop.f32.mrf.mxu0
  %2188 = vdwg.mxu0
  %2189 = vmatpush.bf16.msra.mxu0 %v1833
  %2190 = vmatpush.bf16.msra.mxu0 %v1826
  %2191 = vmatpush.bf16.msra.mxu0 %v1819
  %2192 = vmatpush.bf16.msra.mxu0 %v1812
  %2193 = vmatpush.bf16.msra.mxu0 %v1805
  %2194 = vmatpush.bf16.msra.mxu0 %v1798
  %2195 = vmatpush.bf16.msra.mxu0 %v1791
  %2196 = vmatpush.bf16.msra.mxu0 %v1784
  %2197 = vmatmul.bf16.gmra.mxu0 %v749
  %v2198 = vpop.f32.mrf.mxu0
  %v2199 = vadd.f32 %v2186, %v2198
  %v2200 = vpop.f32.mrf.mxu0
  %2201 = vdwg.mxu0
  %2202 = vmatpush.bf16.msra.mxu0 %v1889
  %2203 = vmatpush.bf16.msra.mxu0 %v1882
  %2204 = vmatpush.bf16.msra.mxu0 %v1875
  %2205 = vmatpush.bf16.msra.mxu0 %v1868
  %2206 = vmatpush.bf16.msra.mxu0 %v1861
  %2207 = vmatpush.bf16.msra.mxu0 %v1854
  %2208 = vmatpush.bf16.msra.mxu0 %v1847
  %2209 = vmatpush.bf16.msra.mxu0 %v1840
  %2210 = vmatmul.bf16.gmra.mxu0 %v750
  %v2211 = vpop.f32.mrf.mxu0
  %v2212 = vadd.f32 %v2199, %v2211
  %v2213 = vpop.f32.mrf.mxu0
  %2214 = vdwg.mxu0
  %2215 = vmatpush.bf16.msra.mxu0 %v1945
  %2216 = vmatpush.bf16.msra.mxu0 %v1938
  %2217 = vmatpush.bf16.msra.mxu0 %v1931
  %2218 = vmatpush.bf16.msra.mxu0 %v1924
  %2219 = vmatpush.bf16.msra.mxu0 %v1917
  %2220 = vmatpush.bf16.msra.mxu0 %v1910
  %2221 = vmatpush.bf16.msra.mxu0 %v1903
  %2222 = vmatpush.bf16.msra.mxu0 %v1896
  %2223 = vmatmul.bf16.gmra.mxu0 %v751
  %v2224 = vpop.f32.mrf.mxu0
  %v2225 = vadd.f32 %v2212, %v2224
  %v2226 = vpop.f32.mrf.mxu0
  %2227 = vdwg.mxu0
  %2228 = vmatpush.bf16.msra.mxu0 %v1778
  %2229 = vmatpush.bf16.msra.mxu0 %v1771
  %2230 = vmatpush.bf16.msra.mxu0 %v1764
  %2231 = vmatpush.bf16.msra.mxu0 %v1757
  %2232 = vmatpush.bf16.msra.mxu0 %v1750
  %2233 = vmatpush.bf16.msra.mxu0 %v1743
  %2234 = vmatpush.bf16.msra.mxu0 %v1736
  %2235 = vmatpush.bf16.msra.mxu0 %v1729
  %2236 = vmatmul.bf16.gmra.mxu0 %v748
  %v2237 = vpop.f32.mrf.mxu0
  %v2238 = vadd.f32 %v1011, %v2237
  %v2239 = vpop.f32.mrf.mxu0
  %2240 = vdwg.mxu0
  %2241 = vmatpush.bf16.msra.mxu0 %v1834
  %2242 = vmatpush.bf16.msra.mxu0 %v1827
  %2243 = vmatpush.bf16.msra.mxu0 %v1820
  %2244 = vmatpush.bf16.msra.mxu0 %v1813
  %2245 = vmatpush.bf16.msra.mxu0 %v1806
  %2246 = vmatpush.bf16.msra.mxu0 %v1799
  %2247 = vmatpush.bf16.msra.mxu0 %v1792
  %2248 = vmatpush.bf16.msra.mxu0 %v1785
  %2249 = vmatmul.bf16.gmra.mxu0 %v749
  %v2250 = vpop.f32.mrf.mxu0
  %v2251 = vadd.f32 %v2238, %v2250
  %v2252 = vpop.f32.mrf.mxu0
  %2253 = vdwg.mxu0
  %2254 = vmatpush.bf16.msra.mxu0 %v1890
  %2255 = vmatpush.bf16.msra.mxu0 %v1883
  %2256 = vmatpush.bf16.msra.mxu0 %v1876
  %2257 = vmatpush.bf16.msra.mxu0 %v1869
  %2258 = vmatpush.bf16.msra.mxu0 %v1862
  %2259 = vmatpush.bf16.msra.mxu0 %v1855
  %2260 = vmatpush.bf16.msra.mxu0 %v1848
  %2261 = vmatpush.bf16.msra.mxu0 %v1841
  %2262 = vmatmul.bf16.gmra.mxu0 %v750
  %v2263 = vpop.f32.mrf.mxu0
  %v2264 = vadd.f32 %v2251, %v2263
  %v2265 = vpop.f32.mrf.mxu0
  %2266 = vdwg.mxu0
  %2267 = vmatpush.bf16.msra.mxu0 %v1946
  %2268 = vmatpush.bf16.msra.mxu0 %v1939
  %2269 = vmatpush.bf16.msra.mxu0 %v1932
  %2270 = vmatpush.bf16.msra.mxu0 %v1925
  %2271 = vmatpush.bf16.msra.mxu0 %v1918
  %2272 = vmatpush.bf16.msra.mxu0 %v1911
  %2273 = vmatpush.bf16.msra.mxu0 %v1904
  %2274 = vmatpush.bf16.msra.mxu0 %v1897
  %2275 = vmatmul.bf16.gmra.mxu0 %v751
  %v2276 = vpop.f32.mrf.mxu0
  %v2277 = vadd.f32 %v2264, %v2276
  %v2278 = vpop.f32.mrf.mxu0
  %2279 = vdwg.mxu0
  %2280 = vmatpush.bf16.msra.mxu0 %v1779
  %2281 = vmatpush.bf16.msra.mxu0 %v1772
  %2282 = vmatpush.bf16.msra.mxu0 %v1765
  %2283 = vmatpush.bf16.msra.mxu0 %v1758
  %2284 = vmatpush.bf16.msra.mxu0 %v1751
  %2285 = vmatpush.bf16.msra.mxu0 %v1744
  %2286 = vmatpush.bf16.msra.mxu0 %v1737
  %2287 = vmatpush.bf16.msra.mxu0 %v1730
  %2288 = vmatmul.bf16.gmra.mxu0 %v748
  %v2289 = vpop.f32.mrf.mxu0
  %v2290 = vadd.f32 %v1012, %v2289
  %v2291 = vpop.f32.mrf.mxu0
  %2292 = vdwg.mxu0
  %2293 = vmatpush.bf16.msra.mxu0 %v1835
  %2294 = vmatpush.bf16.msra.mxu0 %v1828
  %2295 = vmatpush.bf16.msra.mxu0 %v1821
  %2296 = vmatpush.bf16.msra.mxu0 %v1814
  %2297 = vmatpush.bf16.msra.mxu0 %v1807
  %2298 = vmatpush.bf16.msra.mxu0 %v1800
  %2299 = vmatpush.bf16.msra.mxu0 %v1793
  %2300 = vmatpush.bf16.msra.mxu0 %v1786
  %2301 = vmatmul.bf16.gmra.mxu0 %v749
  %v2302 = vpop.f32.mrf.mxu0
  %v2303 = vadd.f32 %v2290, %v2302
  %v2304 = vpop.f32.mrf.mxu0
  %2305 = vdwg.mxu0
  %2306 = vmatpush.bf16.msra.mxu0 %v1891
  %2307 = vmatpush.bf16.msra.mxu0 %v1884
  %2308 = vmatpush.bf16.msra.mxu0 %v1877
  %2309 = vmatpush.bf16.msra.mxu0 %v1870
  %2310 = vmatpush.bf16.msra.mxu0 %v1863
  %2311 = vmatpush.bf16.msra.mxu0 %v1856
  %2312 = vmatpush.bf16.msra.mxu0 %v1849
  %2313 = vmatpush.bf16.msra.mxu0 %v1842
  %2314 = vmatmul.bf16.gmra.mxu0 %v750
  %v2315 = vpop.f32.mrf.mxu0
  %v2316 = vadd.f32 %v2303, %v2315
  %v2317 = vpop.f32.mrf.mxu0
  %2318 = vdwg.mxu0
  %2319 = vmatpush.bf16.msra.mxu0 %v1947
  %2320 = vmatpush.bf16.msra.mxu0 %v1940
  %2321 = vmatpush.bf16.msra.mxu0 %v1933
  %2322 = vmatpush.bf16.msra.mxu0 %v1926
  %2323 = vmatpush.bf16.msra.mxu0 %v1919
  %2324 = vmatpush.bf16.msra.mxu0 %v1912
  %2325 = vmatpush.bf16.msra.mxu0 %v1905
  %2326 = vmatpush.bf16.msra.mxu0 %v1898
  %2327 = vmatmul.bf16.gmra.mxu0 %v751
  %v2328 = vpop.f32.mrf.mxu0
  %v2329 = vadd.f32 %v2316, %v2328
  %v2330 = vpop.f32.mrf.mxu0
  %2331 = vdwg.mxu0
  %2332 = vmatpush.bf16.msra.mxu0 %v1780
  %2333 = vmatpush.bf16.msra.mxu0 %v1773
  %2334 = vmatpush.bf16.msra.mxu0 %v1766
  %2335 = vmatpush.bf16.msra.mxu0 %v1759
  %2336 = vmatpush.bf16.msra.mxu0 %v1752
  %2337 = vmatpush.bf16.msra.mxu0 %v1745
  %2338 = vmatpush.bf16.msra.mxu0 %v1738
  %2339 = vmatpush.bf16.msra.mxu0 %v1731
  %2340 = vmatmul.bf16.gmra.mxu0 %v748
  %v2341 = vpop.f32.mrf.mxu0
  %v2342 = vadd.f32 %v1013, %v2341
  %v2343 = vpop.f32.mrf.mxu0
  %2344 = vdwg.mxu0
  %2345 = vmatpush.bf16.msra.mxu0 %v1836
  %2346 = vmatpush.bf16.msra.mxu0 %v1829
  %2347 = vmatpush.bf16.msra.mxu0 %v1822
  %2348 = vmatpush.bf16.msra.mxu0 %v1815
  %2349 = vmatpush.bf16.msra.mxu0 %v1808
  %2350 = vmatpush.bf16.msra.mxu0 %v1801
  %2351 = vmatpush.bf16.msra.mxu0 %v1794
  %2352 = vmatpush.bf16.msra.mxu0 %v1787
  %2353 = vmatmul.bf16.gmra.mxu0 %v749
  %v2354 = vpop.f32.mrf.mxu0
  %v2355 = vadd.f32 %v2342, %v2354
  %v2356 = vpop.f32.mrf.mxu0
  %2357 = vdwg.mxu0
  %2358 = vmatpush.bf16.msra.mxu0 %v1892
  %2359 = vmatpush.bf16.msra.mxu0 %v1885
  %2360 = vmatpush.bf16.msra.mxu0 %v1878
  %2361 = vmatpush.bf16.msra.mxu0 %v1871
  %2362 = vmatpush.bf16.msra.mxu0 %v1864
  %2363 = vmatpush.bf16.msra.mxu0 %v1857
  %2364 = vmatpush.bf16.msra.mxu0 %v1850
  %2365 = vmatpush.bf16.msra.mxu0 %v1843
  %2366 = vmatmul.bf16.gmra.mxu0 %v750
  %v2367 = vpop.f32.mrf.mxu0
  %v2368 = vadd.f32 %v2355, %v2367
  %v2369 = vpop.f32.mrf.mxu0
  %2370 = vdwg.mxu0
  %2371 = vmatpush.bf16.msra.mxu0 %v1948
  %2372 = vmatpush.bf16.msra.mxu0 %v1941
  %2373 = vmatpush.bf16.msra.mxu0 %v1934
  %2374 = vmatpush.bf16.msra.mxu0 %v1927
  %2375 = vmatpush.bf16.msra.mxu0 %v1920
  %2376 = vmatpush.bf16.msra.mxu0 %v1913
  %2377 = vmatpush.bf16.msra.mxu0 %v1906
  %2378 = vmatpush.bf16.msra.mxu0 %v1899
  %2379 = vmatmul.bf16.gmra.mxu0 %v751
  %v2380 = vpop.f32.mrf.mxu0
  %v2381 = vadd.f32 %v2368, %v2380
  %v2382 = vpop.f32.mrf.mxu0
  %2383 = vdwg.mxu0
  %2384 = vmatpush.bf16.msra.mxu0 %v1781
  %2385 = vmatpush.bf16.msra.mxu0 %v1774
  %2386 = vmatpush.bf16.msra.mxu0 %v1767
  %2387 = vmatpush.bf16.msra.mxu0 %v1760
  %2388 = vmatpush.bf16.msra.mxu0 %v1753
  %2389 = vmatpush.bf16.msra.mxu0 %v1746
  %2390 = vmatpush.bf16.msra.mxu0 %v1739
  %2391 = vmatpush.bf16.msra.mxu0 %v1732
  %2392 = vmatmul.bf16.gmra.mxu0 %v748
  %v2393 = vpop.f32.mrf.mxu0
  %v2394 = vadd.f32 %v1014, %v2393
  %v2395 = vpop.f32.mrf.mxu0
  %2396 = vdwg.mxu0
  %2397 = vmatpush.bf16.msra.mxu0 %v1837
  %2398 = vmatpush.bf16.msra.mxu0 %v1830
  %2399 = vmatpush.bf16.msra.mxu0 %v1823
  %2400 = vmatpush.bf16.msra.mxu0 %v1816
  %2401 = vmatpush.bf16.msra.mxu0 %v1809
  %2402 = vmatpush.bf16.msra.mxu0 %v1802
  %2403 = vmatpush.bf16.msra.mxu0 %v1795
  %2404 = vmatpush.bf16.msra.mxu0 %v1788
  %2405 = vmatmul.bf16.gmra.mxu0 %v749
  %v2406 = vpop.f32.mrf.mxu0
  %v2407 = vadd.f32 %v2394, %v2406
  %v2408 = vpop.f32.mrf.mxu0
  %2409 = vdwg.mxu0
  %2410 = vmatpush.bf16.msra.mxu0 %v1893
  %2411 = vmatpush.bf16.msra.mxu0 %v1886
  %2412 = vmatpush.bf16.msra.mxu0 %v1879
  %2413 = vmatpush.bf16.msra.mxu0 %v1872
  %2414 = vmatpush.bf16.msra.mxu0 %v1865
  %2415 = vmatpush.bf16.msra.mxu0 %v1858
  %2416 = vmatpush.bf16.msra.mxu0 %v1851
  %2417 = vmatpush.bf16.msra.mxu0 %v1844
  %2418 = vmatmul.bf16.gmra.mxu0 %v750
  %v2419 = vpop.f32.mrf.mxu0
  %v2420 = vadd.f32 %v2407, %v2419
  %v2421 = vpop.f32.mrf.mxu0
  %2422 = vdwg.mxu0
  %2423 = vmatpush.bf16.msra.mxu0 %v1949
  %2424 = vmatpush.bf16.msra.mxu0 %v1942
  %2425 = vmatpush.bf16.msra.mxu0 %v1935
  %2426 = vmatpush.bf16.msra.mxu0 %v1928
  %2427 = vmatpush.bf16.msra.mxu0 %v1921
  %2428 = vmatpush.bf16.msra.mxu0 %v1914
  %2429 = vmatpush.bf16.msra.mxu0 %v1907
  %2430 = vmatpush.bf16.msra.mxu0 %v1900
  %2431 = vmatmul.bf16.gmra.mxu0 %v751
  %v2432 = vpop.f32.mrf.mxu0
  %v2433 = vadd.f32 %v2420, %v2432
  %v2434 = vpop.f32.mrf.mxu0
  %2435 = vdwg.mxu0
  %2436 = vmatpush.bf16.msra.mxu0 %v1782
  %2437 = vmatpush.bf16.msra.mxu0 %v1775
  %2438 = vmatpush.bf16.msra.mxu0 %v1768
  %2439 = vmatpush.bf16.msra.mxu0 %v1761
  %2440 = vmatpush.bf16.msra.mxu0 %v1754
  %2441 = vmatpush.bf16.msra.mxu0 %v1747
  %2442 = vmatpush.bf16.msra.mxu0 %v1740
  %2443 = vmatpush.bf16.msra.mxu0 %v1733
  %2444 = vmatmul.bf16.gmra.mxu0 %v748
  %v2445 = vpop.f32.mrf.mxu0
  %v2446 = vadd.f32 %v1015, %v2445
  %v2447 = vpop.f32.mrf.mxu0
  %2448 = vdwg.mxu0
  %2449 = vmatpush.bf16.msra.mxu0 %v1838
  %2450 = vmatpush.bf16.msra.mxu0 %v1831
  %2451 = vmatpush.bf16.msra.mxu0 %v1824
  %2452 = vmatpush.bf16.msra.mxu0 %v1817
  %2453 = vmatpush.bf16.msra.mxu0 %v1810
  %2454 = vmatpush.bf16.msra.mxu0 %v1803
  %2455 = vmatpush.bf16.msra.mxu0 %v1796
  %2456 = vmatpush.bf16.msra.mxu0 %v1789
  %2457 = vmatmul.bf16.gmra.mxu0 %v749
  %v2458 = vpop.f32.mrf.mxu0
  %v2459 = vadd.f32 %v2446, %v2458
  %v2460 = vpop.f32.mrf.mxu0
  %2461 = vdwg.mxu0
  %2462 = vmatpush.bf16.msra.mxu0 %v1894
  %2463 = vmatpush.bf16.msra.mxu0 %v1887
  %2464 = vmatpush.bf16.msra.mxu0 %v1880
  %2465 = vmatpush.bf16.msra.mxu0 %v1873
  %2466 = vmatpush.bf16.msra.mxu0 %v1866
  %2467 = vmatpush.bf16.msra.mxu0 %v1859
  %2468 = vmatpush.bf16.msra.mxu0 %v1852
  %2469 = vmatpush.bf16.msra.mxu0 %v1845
  %2470 = vmatmul.bf16.gmra.mxu0 %v750
  %v2471 = vpop.f32.mrf.mxu0
  %v2472 = vadd.f32 %v2459, %v2471
  %v2473 = vpop.f32.mrf.mxu0
  %2474 = vdwg.mxu0
  %2475 = vmatpush.bf16.msra.mxu0 %v1950
  %2476 = vmatpush.bf16.msra.mxu0 %v1943
  %2477 = vmatpush.bf16.msra.mxu0 %v1936
  %2478 = vmatpush.bf16.msra.mxu0 %v1929
  %2479 = vmatpush.bf16.msra.mxu0 %v1922
  %2480 = vmatpush.bf16.msra.mxu0 %v1915
  %2481 = vmatpush.bf16.msra.mxu0 %v1908
  %2482 = vmatpush.bf16.msra.mxu0 %v1901
  %2483 = vmatmul.bf16.gmra.mxu0 %v751
  %v2484 = vpop.f32.mrf.mxu0
  %v2485 = vadd.f32 %v2472, %v2484
  %v2486 = vpop.f32.mrf.mxu0
  %2487 = vdwg.mxu0
  %2488 = vmatpush.bf16.msra.mxu0 %v1783
  %2489 = vmatpush.bf16.msra.mxu0 %v1776
  %2490 = vmatpush.bf16.msra.mxu0 %v1769
  %2491 = vmatpush.bf16.msra.mxu0 %v1762
  %2492 = vmatpush.bf16.msra.mxu0 %v1755
  %2493 = vmatpush.bf16.msra.mxu0 %v1748
  %2494 = vmatpush.bf16.msra.mxu0 %v1741
  %2495 = vmatpush.bf16.msra.mxu0 %v1734
  %2496 = vmatmul.bf16.gmra.mxu0 %v748
  %v2497 = vpop.f32.mrf.mxu0
  %v2498 = vadd.f32 %v1016, %v2497
  %v2499 = vpop.f32.mrf.mxu0
  %2500 = vdwg.mxu0
  %2501 = vmatpush.bf16.msra.mxu0 %v1839
  %2502 = vmatpush.bf16.msra.mxu0 %v1832
  %2503 = vmatpush.bf16.msra.mxu0 %v1825
  %2504 = vmatpush.bf16.msra.mxu0 %v1818
  %2505 = vmatpush.bf16.msra.mxu0 %v1811
  %2506 = vmatpush.bf16.msra.mxu0 %v1804
  %2507 = vmatpush.bf16.msra.mxu0 %v1797
  %2508 = vmatpush.bf16.msra.mxu0 %v1790
  %2509 = vmatmul.bf16.gmra.mxu0 %v749
  %v2510 = vpop.f32.mrf.mxu0
  %v2511 = vadd.f32 %v2498, %v2510
  %v2512 = vpop.f32.mrf.mxu0
  %2513 = vdwg.mxu0
  %2514 = vmatpush.bf16.msra.mxu0 %v1895
  %2515 = vmatpush.bf16.msra.mxu0 %v1888
  %2516 = vmatpush.bf16.msra.mxu0 %v1881
  %2517 = vmatpush.bf16.msra.mxu0 %v1874
  %2518 = vmatpush.bf16.msra.mxu0 %v1867
  %2519 = vmatpush.bf16.msra.mxu0 %v1860
  %2520 = vmatpush.bf16.msra.mxu0 %v1853
  %2521 = vmatpush.bf16.msra.mxu0 %v1846
  %2522 = vmatmul.bf16.gmra.mxu0 %v750
  %v2523 = vpop.f32.mrf.mxu0
  %v2524 = vadd.f32 %v2511, %v2523
  %v2525 = vpop.f32.mrf.mxu0
  %2526 = vdwg.mxu0
  %2527 = vmatpush.bf16.msra.mxu0 %v1951
  %2528 = vmatpush.bf16.msra.mxu0 %v1944
  %2529 = vmatpush.bf16.msra.mxu0 %v1937
  %2530 = vmatpush.bf16.msra.mxu0 %v1930
  %2531 = vmatpush.bf16.msra.mxu0 %v1923
  %2532 = vmatpush.bf16.msra.mxu0 %v1916
  %2533 = vmatpush.bf16.msra.mxu0 %v1909
  %2534 = vmatpush.bf16.msra.mxu0 %v1902
  %2535 = vmatmul.bf16.gmra.mxu0 %v751
  %v2536 = vpop.f32.mrf.mxu0
  %v2537 = vadd.f32 %v2524, %v2536
  %v2538 = vpop.f32.mrf.mxu0
  %2539 = vdwg.mxu0
  %v2540 = vtanh.pop %v2225
  %v2541 = vtanh.pop %v2277
  %v2542 = vtanh.pop %v2329
  %v2543 = vtanh.pop %v2381
  %v2544 = vtanh.pop %v2433
  %v2545 = vtanh.pop %v2485
  %v2546 = vtanh.pop %v2537
  %2547 = vst [vmem:[%s9] sm:$0xff] %v2540
  %2548 = vst [vmem:[%s9 + $0x8] sm:$0xff] %v2541
  %2549 = vst [vmem:[%s9 + $0x10] sm:$0xff] %v2542
  %2550 = vst [vmem:[%s9 + $0x18] sm:$0xff] %v2543
  %2551 = vst [vmem:[%s9 + $0x20] sm:$0xff] %v2544
  %2552 = vst [vmem:[%s9 + $0x28] sm:$0xff] %v2545
  %vm2553 = vcmask 130048
  %2554 = vst.msk [vmem:[%s9 + $0x30] sm:$0xff] %vm2553, %v2546
  // Predicated region
  $region38: #{generator_forward.1} parent=0 // pred_check
    _
  $region39: #{generator_forward.1} parent=0 // pred_check_branch
    %2556 = sbr.rel (0) target = $region41
  $region40: #{generator_forward.1} parent=0 // pred_region
    _
  $region41: #{generator_forward.1} parent=0 // pred_fallthru
    _
  // Predicated region
  $region42: #{generator_forward.1} parent=0 // pred_check
    _
  $region43: #{generator_forward.1} parent=0 // pred_check_branch
    %2558 = sbr.rel (0) target = $region45
  $region44: #{generator_forward.1} parent=0 // pred_region
    _
  $region45: #{generator_forward.1} parent=0 // pred_fallthru
    _

</llo_original>
